<compile_context>
chip_gen: v7x
topology: tpu7x:2x2x1
jax: 0.10.0
libtpu: 0.0.40
codegen_flags: <defaults>
</compile_context>

<pallas_src>
import math
import jax
import jax.numpy as jnp
from jax.experimental import pallas as pl
from jax.experimental.pallas import tpu as pltpu

# ---------------- config (small, consistent with the module) ----------------
B = 2           # batch
T = 8           # sequence length (block_size)
C = 32          # n_embd
NH = 4          # n_head
HD = C // NH    # head dim
BT = B * T      # flattened token rows
EPS = 1e-5      # nn.LayerNorm default eps


def _layernorm(v, gamma, beta):
    mu = jnp.mean(v, axis=-1, keepdims=True)
    var = jnp.mean((v - mu) ** 2, axis=-1, keepdims=True)   # biased, like torch
    return (v - mu) * jax.lax.rsqrt(var + EPS) * gamma + beta


def transformer_block_kernel(x_ref, vecs_ref, mask_ref,
                             wqkv_ref, wo_ref, wfc_ref, wpr_ref, o_ref):
    x = x_ref[...]                         # (BT, C) f32 — whole batch resident
    vecs = vecs_ref[...]                   # (8, 4C) f32 packed small params
    ln1g = vecs[0:1, :C]
    ln1b = vecs[1:2, :C]
    ln2g = vecs[2:3, :C]
    ln2b = vecs[3:4, :C]
    bo   = vecs[4:5, :C]
    bpr  = vecs[5:6, :C]
    bqkv = vecs[6:7, :3 * C]
    bfc  = vecs[7:8, :4 * C]

    # ---- attention branch --------------------------------------------------
    h = _layernorm(x, ln1g, ln1b)                                   # (BT, C)
    qkv = jnp.dot(h.astype(jnp.bfloat16), wqkv_ref[...],
                  preferred_element_type=jnp.float32) + bqkv        # (BT, 3C)
    # (1/sqrt(HD) already folded into the q columns of wqkv in the wrapper.)

    # Stack all heads along the leading axis -> (NH*B, T, HD); only sublane
    # reshapes + leading-axis concat (no lane-splitting reshapes / transposes).
    qs = jnp.concatenate([qkv[:, 0 * C + hh * HD: 0 * C + (hh + 1) * HD]
                          .reshape(B, T, HD) for hh in range(NH)], axis=0)
    ks = jnp.concatenate([qkv[:, 1 * C + hh * HD: 1 * C + (hh + 1) * HD]
                          .reshape(B, T, HD) for hh in range(NH)], axis=0)
    vs = jnp.concatenate([qkv[:, 2 * C + hh * HD: 2 * C + (hh + 1) * HD]
                          .reshape(B, T, HD) for hh in range(NH)], axis=0)

    # One batched score einsum + one softmax + one context einsum for all heads.
    s = jnp.einsum('bqd,bkd->bqk', qs, ks,
                   preferred_element_type=jnp.float32)              # (NH*B, T, T)
    s = s + mask_ref[...]                # additive causal mask (0 / -1e30)
    s = s - jnp.max(s, axis=-1, keepdims=True)
    p = jnp.exp(s)
    p = p * pl.reciprocal(jnp.sum(p, axis=-1, keepdims=True), approx=True)
    ctx = jnp.einsum('bqk,bkd->bqd', p, vs,
                     preferred_element_type=jnp.float32)            # (NH*B, T, HD)

    # Head merge: lane concat back to (BT, C), then ONE output projection.
    ctx2 = jnp.concatenate([ctx[hh * B:(hh + 1) * B].reshape(BT, HD)
                            for hh in range(NH)], axis=-1)          # (BT, C)
    attn = jnp.dot(ctx2.astype(jnp.bfloat16), wo_ref[...],
                   preferred_element_type=jnp.float32) + bo
    x = x + attn                                                    # residual 1

    # ---- MLP branch ---------------------------------------------------------
    h2 = _layernorm(x, ln2g, ln2b)
    ff = jnp.dot(h2.astype(jnp.bfloat16), wfc_ref[...],
                 preferred_element_type=jnp.float32) + bfc          # (BT, 4C)
    ff = jax.nn.gelu(ff, approximate=True)          # tanh GELU -> EUP slot
    ff = jnp.dot(ff.astype(jnp.bfloat16), wpr_ref[...],
                 preferred_element_type=jnp.float32) + bpr          # (BT, C)

    o_ref[...] = x + ff                                             # residual 2


def transformer_block(x, params):
    """x: (B, T, C) float32 -> (B, T, C) float32."""
    (ln1g, ln1b, wqkv, bqkv, wo, bo, ln2g, ln2b, wfc, bfc, wpr, bpr) = params

    # Fold the attention scale into the q projection (free at runtime).
    scale = 1.0 / math.sqrt(HD)
    wqkv_s = wqkv.at[:, :C].multiply(scale)
    bqkv_s = bqkv.at[:, :C].multiply(scale)

    # Pack the 8 small per-row params into one (8, 4C) f32 slab (one DMA).
    vecs = jnp.zeros((8, 4 * C), jnp.float32)
    vecs = vecs.at[0, :C].set(ln1g[0]).at[1, :C].set(ln1b[0])
    vecs = vecs.at[2, :C].set(ln2g[0]).at[3, :C].set(ln2b[0])
    vecs = vecs.at[4, :C].set(bo[0]).at[5, :C].set(bpr[0])
    vecs = vecs.at[6, :3 * C].set(bqkv_s[0]).at[7, :4 * C].set(bfc[0])

    # Additive causal mask, built once outside the kernel.
    row = jnp.arange(T)[:, None]
    col = jnp.arange(T)[None, :]
    addmask = jnp.where(row >= col, 0.0, -1e30).astype(jnp.float32)  # (T, T)

    # bf16 MXU operands (f32 accumulation happens in-kernel).
    wqkv_b = wqkv_s.astype(jnp.bfloat16)
    wo_b = wo.astype(jnp.bfloat16)
    wfc_b = wfc.astype(jnp.bfloat16)
    wpr_b = wpr.astype(jnp.bfloat16)

    x2 = x.reshape(BT, C)                 # collapse batch into token rows

    full = lambda a: pl.BlockSpec(a.shape, lambda i: (0,) * a.ndim)
    grid_spec = pltpu.PrefetchScalarGridSpec(
        num_scalar_prefetch=0,
        grid=(1,),                        # single invocation: no per-step overhead
        in_specs=[
            full(x2), full(vecs), full(addmask),
            full(wqkv_b), full(wo_b), full(wfc_b), full(wpr_b),
        ],
        out_specs=pl.BlockSpec((BT, C), lambda i: (0, 0)),
    )

    out2 = pl.pallas_call(
        transformer_block_kernel,
        out_shape=jax.ShapeDtypeStruct((BT, C), jnp.float32),
        grid_spec=grid_spec,
        compiler_params=pltpu.CompilerParams(
            dimension_semantics=("arbitrary",)),
    )(x2, vecs, addmask, wqkv_b, wo_b, wfc_b, wpr_b)

    return out2.reshape(B, T, C)


def transformer_block_ref(x, params):
    """Pure-JAX f32 reference (exact softmax, exact erf GELU) for validation."""
    (ln1g, ln1b, wqkv, bqkv, wo, bo, ln2g, ln2b, wfc, bfc, wpr, bpr) = params

    def ln(v, g, b):
        mu = jnp.mean(v, -1, keepdims=True)
        var = jnp.mean((v - mu) ** 2, -1, keepdims=True)
        return (v - mu) * jax.lax.rsqrt(var + EPS) * g[0] + b[0]

    h = ln(x, ln1g, ln1b)
    qkv = h @ wqkv + bqkv[0]
    q, k, v = jnp.split(qkv, 3, axis=-1)
    sh = lambda a: a.reshape(B, T, NH, HD).transpose(0, 2, 1, 3)
    q, k, v = sh(q), sh(k), sh(v)
    s = jnp.einsum('bhqd,bhkd->bhqk', q, k) / math.sqrt(HD)
    causal = jnp.tril(jnp.ones((T, T), bool))
    s = jnp.where(causal, s, -jnp.inf)
    p = jax.nn.softmax(s, axis=-1)
    ctx = jnp.einsum('bhqk,bhkd->bhqd', p, v).transpose(0, 2, 1, 3).reshape(B, T, C)
    x = x + ctx @ wo + bo[0]
    h2 = ln(x, ln2g, ln2b)
    ff = h2 @ wfc + bfc[0]
    ff = 0.5 * ff * (1.0 + jax.lax.erf(ff / math.sqrt(2.0)))
    return x + ff @ wpr + bpr[0]


def init_params(key):
    """Deterministic synthetic parameters (shapes follow the module's __init__).
    Linear weights are stored pre-transposed to [in, out]; biases are [1, dim]."""
    ks = jax.random.split(key, 8)
    std = 0.02
    wqkv = jax.random.normal(ks[0], (C, 3 * C), jnp.float32) * std
    bqkv = jax.random.normal(ks[1], (1, 3 * C), jnp.float32) * std
    wo = jax.random.normal(ks[2], (C, C), jnp.float32) * std
    bo = jax.random.normal(ks[3], (1, C), jnp.float32) * std
    wfc = jax.random.normal(ks[4], (C, 4 * C), jnp.float32) * std
    bfc = jax.random.normal(ks[5], (1, 4 * C), jnp.float32) * std
    wpr = jax.random.normal(ks[6], (4 * C, C), jnp.float32) * std
    bpr = jax.random.normal(ks[7], (1, C), jnp.float32) * std
    ln1g = jnp.ones((1, C), jnp.float32)
    ln1b = jnp.zeros((1, C), jnp.float32)
    ln2g = jnp.ones((1, C), jnp.float32)
    ln2b = jnp.zeros((1, C), jnp.float32)
    return (ln1g, ln1b, wqkv, bqkv, wo, bo, ln2g, ln2b, wfc, bfc, wpr, bpr)


if __name__ == "__main__":
    key = jax.random.PRNGKey(0)
    kx, kp = jax.random.split(key)
    x = jax.random.normal(kx, (B, T, C), jnp.float32)
    params = init_params(kp)

    out = transformer_block(x, params)
    jax.block_until_ready(out)
    assert out.shape == (B, T, C) and out.dtype == jnp.float32

    ref = transformer_block_ref(x, params)
    err = float(jnp.max(jnp.abs(out - ref)))
    # Loose tolerance: bf16 matmul operands, tanh GELU and approx reciprocal
    # deviate from the exact-f32 reference by ~1e-3 at these magnitudes.
    assert err < 3e-2, f"max abs err {err}"

    print("KERNEL_OK")
</pallas_src>

<mosaic_0001>
module attributes {stable_mosaic.version = 11 : i64} {
  func.func @transformer_block_kernel(%arg0: i32, %arg1: memref<16x32xf32, #tpu.memory_space<vmem>>, %arg2: memref<8x128xf32, #tpu.memory_space<vmem>>, %arg3: memref<8x8xf32, #tpu.memory_space<vmem>>, %arg4: memref<32x96xbf16, #tpu.memory_space<vmem>>, %arg5: memref<32x32xbf16, #tpu.memory_space<vmem>>, %arg6: memref<32x128xbf16, #tpu.memory_space<vmem>>, %arg7: memref<128x32xbf16, #tpu.memory_space<vmem>>, %arg8: memref<16x32xf32, #tpu.memory_space<vmem>>) attributes {dimension_semantics = [#tpu.dimension_semantics<arbitrary>], iteration_bounds = array<i64: 1>, scalar_prefetch = 0 : i64, scratch_operands = 0 : i64, tpu.core_type = #tpu.core_type<tc>, window_params = [{pipeline_mode = #tpu.pipeline_mode<synchronous>, transform_indices = @transform_0, window_bounds = array<i64: 16, 32>}, {pipeline_mode = #tpu.pipeline_mode<synchronous>, transform_indices = @transform_1, window_bounds = array<i64: 8, 128>}, {pipeline_mode = #tpu.pipeline_mode<synchronous>, transform_indices = @transform_2, window_bounds = array<i64: 8, 8>}, {pipeline_mode = #tpu.pipeline_mode<synchronous>, transform_indices = @transform_3, window_bounds = array<i64: 32, 96>}, {pipeline_mode = #tpu.pipeline_mode<synchronous>, transform_indices = @transform_4, window_bounds = array<i64: 32, 32>}, {pipeline_mode = #tpu.pipeline_mode<synchronous>, transform_indices = @transform_5, window_bounds = array<i64: 32, 128>}, {pipeline_mode = #tpu.pipeline_mode<synchronous>, transform_indices = @transform_6, window_bounds = array<i64: 128, 32>}, {pipeline_mode = #tpu.pipeline_mode<synchronous>, transform_indices = @transform_7, window_bounds = array<i64: 16, 32>}]} {
    %c0 = arith.constant 0 : index
    %c0_0 = arith.constant 0 : index
    %0 = vector.load %arg1[%c0, %c0_0] : memref<16x32xf32, #tpu.memory_space<vmem>>, vector<16x32xf32>
    %c0_1 = arith.constant 0 : index
    %c0_2 = arith.constant 0 : index
    %1 = vector.load %arg2[%c0_1, %c0_2] : memref<8x128xf32, #tpu.memory_space<vmem>>, vector<8x128xf32>
    %2 = vector.extract_strided_slice %1 {offsets = [0, 0], sizes = [1, 32], strides = [1, 1]} : vector<8x128xf32> to vector<1x32xf32>
    %3 = vector.extract_strided_slice %1 {offsets = [1, 0], sizes = [1, 32], strides = [1, 1]} : vector<8x128xf32> to vector<1x32xf32>
    %4 = vector.extract_strided_slice %1 {offsets = [2, 0], sizes = [1, 32], strides = [1, 1]} : vector<8x128xf32> to vector<1x32xf32>
    %5 = vector.extract_strided_slice %1 {offsets = [3, 0], sizes = [1, 32], strides = [1, 1]} : vector<8x128xf32> to vector<1x32xf32>
    %6 = vector.extract_strided_slice %1 {offsets = [4, 0], sizes = [1, 32], strides = [1, 1]} : vector<8x128xf32> to vector<1x32xf32>
    %7 = vector.extract_strided_slice %1 {offsets = [5, 0], sizes = [1, 32], strides = [1, 1]} : vector<8x128xf32> to vector<1x32xf32>
    %8 = vector.extract_strided_slice %1 {offsets = [6, 0], sizes = [1, 96], strides = [1, 1]} : vector<8x128xf32> to vector<1x96xf32>
    %9 = vector.extract_strided_slice %1 {offsets = [7, 0], sizes = [1, 128], strides = [1, 1]} : vector<8x128xf32> to vector<1x128xf32>
    %cst = arith.constant dense<0.000000e+00> : vector<16xf32>
    %10 = vector.multi_reduction <add>, %0, %cst [1] : vector<16x32xf32> to vector<16xf32>
    %11 = vector.shape_cast %10 : vector<16xf32> to vector<16x1xf32>
    %cst_3 = arith.constant 3.200000e+01 : f32
    %12 = vector.broadcast %cst_3 : f32 to vector<16x1xf32>
    %13 = arith.divf %11, %12 : vector<16x1xf32>
    %14 = vector.broadcast %13 : vector<16x1xf32> to vector<16x32xf32>
    %15 = arith.subf %0, %14 : vector<16x32xf32>
    %16 = arith.mulf %15, %15 : vector<16x32xf32>
    %cst_4 = arith.constant dense<0.000000e+00> : vector<16xf32>
    %17 = vector.multi_reduction <add>, %16, %cst_4 [1] : vector<16x32xf32> to vector<16xf32>
    %18 = vector.shape_cast %17 : vector<16xf32> to vector<16x1xf32>
    %cst_5 = arith.constant 3.200000e+01 : f32
    %19 = vector.broadcast %cst_5 : f32 to vector<16x1xf32>
    %20 = arith.divf %18, %19 : vector<16x1xf32>
    %21 = vector.broadcast %13 : vector<16x1xf32> to vector<16x32xf32>
    %22 = arith.subf %0, %21 : vector<16x32xf32>
    %cst_6 = arith.constant 9.99999974E-6 : f32
    %23 = vector.broadcast %cst_6 : f32 to vector<16x1xf32>
    %24 = arith.addf %20, %23 : vector<16x1xf32>
    %25 = math.rsqrt %24 : vector<16x1xf32>
    %26 = vector.broadcast %25 : vector<16x1xf32> to vector<16x32xf32>
    %27 = arith.mulf %22, %26 : vector<16x32xf32>
    %28 = vector.broadcast %2 : vector<1x32xf32> to vector<16x32xf32>
    %29 = arith.mulf %27, %28 : vector<16x32xf32>
    %30 = vector.broadcast %3 : vector<1x32xf32> to vector<16x32xf32>
    %31 = arith.addf %29, %30 : vector<16x32xf32>
    %32 = arith.truncf %31 : vector<16x32xf32> to vector<16x32xbf16>
    %c0_7 = arith.constant 0 : index
    %c0_8 = arith.constant 0 : index
    %33 = vector.load %arg4[%c0_7, %c0_8] : memref<32x96xbf16, #tpu.memory_space<vmem>>, vector<32x96xbf16>
    %cst_9 = arith.constant dense<0.000000e+00> : vector<16x96xf32>
    %34 = tpu.matmul %32, %33, %cst_9 {dimension_numbers = #tpu.dot_dimension_numbers<[1], [0], [0], [1], [0, 0, 1, 1], [], []>} : vector<16x32xbf16>, vector<32x96xbf16>, vector<16x96xf32> -> vector<16x96xf32>
    %35 = vector.broadcast %8 : vector<1x96xf32> to vector<16x96xf32>
    %36 = arith.addf %34, %35 : vector<16x96xf32>
    %37 = vector.extract_strided_slice %36 {offsets = [0, 0], sizes = [16, 8], strides = [1, 1]} : vector<16x96xf32> to vector<16x8xf32>
    %38 = vector.shape_cast %37 : vector<16x8xf32> to vector<2x8x8xf32>
    %39 = vector.extract_strided_slice %36 {offsets = [0, 8], sizes = [16, 8], strides = [1, 1]} : vector<16x96xf32> to vector<16x8xf32>
    %40 = vector.shape_cast %39 : vector<16x8xf32> to vector<2x8x8xf32>
    %41 = vector.extract_strided_slice %36 {offsets = [0, 16], sizes = [16, 8], strides = [1, 1]} : vector<16x96xf32> to vector<16x8xf32>
    %42 = vector.shape_cast %41 : vector<16x8xf32> to vector<2x8x8xf32>
    %43 = vector.extract_strided_slice %36 {offsets = [0, 24], sizes = [16, 8], strides = [1, 1]} : vector<16x96xf32> to vector<16x8xf32>
    %44 = vector.shape_cast %43 : vector<16x8xf32> to vector<2x8x8xf32>
    %45 = tpu.concatenate %38, %40, %42, %44 in 0 : vector<2x8x8xf32>, vector<2x8x8xf32>, vector<2x8x8xf32>, vector<2x8x8xf32> -> vector<8x8x8xf32>
    %46 = vector.extract_strided_slice %36 {offsets = [0, 32], sizes = [16, 8], strides = [1, 1]} : vector<16x96xf32> to vector<16x8xf32>
    %47 = vector.shape_cast %46 : vector<16x8xf32> to vector<2x8x8xf32>
    %48 = vector.extract_strided_slice %36 {offsets = [0, 40], sizes = [16, 8], strides = [1, 1]} : vector<16x96xf32> to vector<16x8xf32>
    %49 = vector.shape_cast %48 : vector<16x8xf32> to vector<2x8x8xf32>
    %50 = vector.extract_strided_slice %36 {offsets = [0, 48], sizes = [16, 8], strides = [1, 1]} : vector<16x96xf32> to vector<16x8xf32>
    %51 = vector.shape_cast %50 : vector<16x8xf32> to vector<2x8x8xf32>
    %52 = vector.extract_strided_slice %36 {offsets = [0, 56], sizes = [16, 8], strides = [1, 1]} : vector<16x96xf32> to vector<16x8xf32>
    %53 = vector.shape_cast %52 : vector<16x8xf32> to vector<2x8x8xf32>
    %54 = tpu.concatenate %47, %49, %51, %53 in 0 : vector<2x8x8xf32>, vector<2x8x8xf32>, vector<2x8x8xf32>, vector<2x8x8xf32> -> vector<8x8x8xf32>
    %55 = vector.extract_strided_slice %36 {offsets = [0, 64], sizes = [16, 8], strides = [1, 1]} : vector<16x96xf32> to vector<16x8xf32>
    %56 = vector.shape_cast %55 : vector<16x8xf32> to vector<2x8x8xf32>
    %57 = vector.extract_strided_slice %36 {offsets = [0, 72], sizes = [16, 8], strides = [1, 1]} : vector<16x96xf32> to vector<16x8xf32>
    %58 = vector.shape_cast %57 : vector<16x8xf32> to vector<2x8x8xf32>
    %59 = vector.extract_strided_slice %36 {offsets = [0, 80], sizes = [16, 8], strides = [1, 1]} : vector<16x96xf32> to vector<16x8xf32>
    %60 = vector.shape_cast %59 : vector<16x8xf32> to vector<2x8x8xf32>
    %61 = vector.extract_strided_slice %36 {offsets = [0, 88], sizes = [16, 8], strides = [1, 1]} : vector<16x96xf32> to vector<16x8xf32>
    %62 = vector.shape_cast %61 : vector<16x8xf32> to vector<2x8x8xf32>
    %63 = tpu.concatenate %56, %58, %60, %62 in 0 : vector<2x8x8xf32>, vector<2x8x8xf32>, vector<2x8x8xf32>, vector<2x8x8xf32> -> vector<8x8x8xf32>
    "tpu.trace_start"() <{level = 10 : i32, message = "bqd,bkd->bqk"}> : () -> ()
    %cst_10 = arith.constant dense<0.000000e+00> : vector<8x8x8xf32>
    %64 = tpu.matmul %45, %54, %cst_10 {dimension_numbers = #tpu.dot_dimension_numbers<[2], [2], [1], [1], [0, 0, 0, 1, 1, 1], [0], [0]>} : vector<8x8x8xf32>, vector<8x8x8xf32>, vector<8x8x8xf32> -> vector<8x8x8xf32>
    "tpu.trace_stop"() : () -> ()
    %c0_11 = arith.constant 0 : index
    %c0_12 = arith.constant 0 : index
    %65 = vector.load %arg3[%c0_11, %c0_12] : memref<8x8xf32, #tpu.memory_space<vmem>>, vector<8x8xf32>
    %66 = vector.shape_cast %65 : vector<8x8xf32> to vector<1x8x8xf32>
    %67 = vector.broadcast %66 : vector<1x8x8xf32> to vector<8x8x8xf32>
    %68 = arith.addf %64, %67 : vector<8x8x8xf32>
    %cst_13 = arith.constant dense<0xFF800000> : vector<8x8xf32>
    %69 = vector.multi_reduction <maximumf>, %68, %cst_13 [2] : vector<8x8x8xf32> to vector<8x8xf32>
    %70 = vector.shape_cast %69 : vector<8x8xf32> to vector<8x8x1xf32>
    %71 = vector.broadcast %70 : vector<8x8x1xf32> to vector<8x8x8xf32>
    %72 = arith.subf %68, %71 : vector<8x8x8xf32>
    %73 = math.exp %72 : vector<8x8x8xf32>
    %cst_14 = arith.constant dense<0.000000e+00> : vector<8x8xf32>
    %74 = vector.multi_reduction <add>, %73, %cst_14 [2] : vector<8x8x8xf32> to vector<8x8xf32>
    %75 = vector.shape_cast %74 : vector<8x8xf32> to vector<8x8x1xf32>
    %76 = tpu.reciprocal %75 {approx = true} : vector<8x8x1xf32> -> vector<8x8x1xf32>
    %77 = vector.broadcast %76 : vector<8x8x1xf32> to vector<8x8x8xf32>
    %78 = arith.mulf %73, %77 : vector<8x8x8xf32>
    "tpu.trace_start"() <{level = 10 : i32, message = "bqk,bkd->bqd"}> : () -> ()
    %cst_15 = arith.constant dense<0.000000e+00> : vector<8x8x8xf32>
    %79 = tpu.matmul %78, %63, %cst_15 {dimension_numbers = #tpu.dot_dimension_numbers<[2], [1], [1], [2], [0, 0, 0, 1, 1, 2], [0], [0]>} : vector<8x8x8xf32>, vector<8x8x8xf32>, vector<8x8x8xf32> -> vector<8x8x8xf32>
    "tpu.trace_stop"() : () -> ()
    %80 = vector.extract_strided_slice %79 {offsets = [0, 0, 0], sizes = [2, 8, 8], strides = [1, 1, 1]} : vector<8x8x8xf32> to vector<2x8x8xf32>
    %81 = vector.shape_cast %80 : vector<2x8x8xf32> to vector<16x8xf32>
    %82 = vector.extract_strided_slice %79 {offsets = [2, 0, 0], sizes = [2, 8, 8], strides = [1, 1, 1]} : vector<8x8x8xf32> to vector<2x8x8xf32>
    %83 = vector.shape_cast %82 : vector<2x8x8xf32> to vector<16x8xf32>
    %84 = vector.extract_strided_slice %79 {offsets = [4, 0, 0], sizes = [2, 8, 8], strides = [1, 1, 1]} : vector<8x8x8xf32> to vector<2x8x8xf32>
    %85 = vector.shape_cast %84 : vector<2x8x8xf32> to vector<16x8xf32>
    %86 = vector.extract_strided_slice %79 {offsets = [6, 0, 0], sizes = [2, 8, 8], strides = [1, 1, 1]} : vector<8x8x8xf32> to vector<2x8x8xf32>
    %87 = vector.shape_cast %86 : vector<2x8x8xf32> to vector<16x8xf32>
    %88 = tpu.concatenate %81, %83, %85, %87 in 1 : vector<16x8xf32>, vector<16x8xf32>, vector<16x8xf32>, vector<16x8xf32> -> vector<16x32xf32>
    %89 = arith.truncf %88 : vector<16x32xf32> to vector<16x32xbf16>
    %c0_16 = arith.constant 0 : index
    %c0_17 = arith.constant 0 : index
    %90 = vector.load %arg5[%c0_16, %c0_17] : memref<32x32xbf16, #tpu.memory_space<vmem>>, vector<32x32xbf16>
    %cst_18 = arith.constant dense<0.000000e+00> : vector<16x32xf32>
    %91 = tpu.matmul %89, %90, %cst_18 {dimension_numbers = #tpu.dot_dimension_numbers<[1], [0], [0], [1], [0, 0, 1, 1], [], []>} : vector<16x32xbf16>, vector<32x32xbf16>, vector<16x32xf32> -> vector<16x32xf32>
    %92 = vector.broadcast %6 : vector<1x32xf32> to vector<16x32xf32>
    %93 = arith.addf %91, %92 : vector<16x32xf32>
    %94 = arith.addf %0, %93 : vector<16x32xf32>
    %cst_19 = arith.constant dense<0.000000e+00> : vector<16xf32>
    %95 = vector.multi_reduction <add>, %94, %cst_19 [1] : vector<16x32xf32> to vector<16xf32>
    %96 = vector.shape_cast %95 : vector<16xf32> to vector<16x1xf32>
    %cst_20 = arith.constant 3.200000e+01 : f32
    %97 = vector.broadcast %cst_20 : f32 to vector<16x1xf32>
    %98 = arith.divf %96, %97 : vector<16x1xf32>
    %99 = vector.broadcast %98 : vector<16x1xf32> to vector<16x32xf32>
    %100 = arith.subf %94, %99 : vector<16x32xf32>
    %101 = arith.mulf %100, %100 : vector<16x32xf32>
    %cst_21 = arith.constant dense<0.000000e+00> : vector<16xf32>
    %102 = vector.multi_reduction <add>, %101, %cst_21 [1] : vector<16x32xf32> to vector<16xf32>
    %103 = vector.shape_cast %102 : vector<16xf32> to vector<16x1xf32>
    %cst_22 = arith.constant 3.200000e+01 : f32
    %104 = vector.broadcast %cst_22 : f32 to vector<16x1xf32>
    %105 = arith.divf %103, %104 : vector<16x1xf32>
    %106 = vector.broadcast %98 : vector<16x1xf32> to vector<16x32xf32>
    %107 = arith.subf %94, %106 : vector<16x32xf32>
    %cst_23 = arith.constant 9.99999974E-6 : f32
    %108 = vector.broadcast %cst_23 : f32 to vector<16x1xf32>
    %109 = arith.addf %105, %108 : vector<16x1xf32>
    %110 = math.rsqrt %109 : vector<16x1xf32>
    %111 = vector.broadcast %110 : vector<16x1xf32> to vector<16x32xf32>
    %112 = arith.mulf %107, %111 : vector<16x32xf32>
    %113 = vector.broadcast %4 : vector<1x32xf32> to vector<16x32xf32>
    %114 = arith.mulf %112, %113 : vector<16x32xf32>
    %115 = vector.broadcast %5 : vector<1x32xf32> to vector<16x32xf32>
    %116 = arith.addf %114, %115 : vector<16x32xf32>
    %117 = arith.truncf %116 : vector<16x32xf32> to vector<16x32xbf16>
    %c0_24 = arith.constant 0 : index
    %c0_25 = arith.constant 0 : index
    %118 = vector.load %arg6[%c0_24, %c0_25] : memref<32x128xbf16, #tpu.memory_space<vmem>>, vector<32x128xbf16>
    %cst_26 = arith.constant dense<0.000000e+00> : vector<16x128xf32>
    %119 = tpu.matmul %117, %118, %cst_26 {dimension_numbers = #tpu.dot_dimension_numbers<[1], [0], [0], [1], [0, 0, 1, 1], [], []>} : vector<16x32xbf16>, vector<32x128xbf16>, vector<16x128xf32> -> vector<16x128xf32>
    %120 = vector.broadcast %9 : vector<1x128xf32> to vector<16x128xf32>
    %121 = arith.addf %119, %120 : vector<16x128xf32>
    %122 = arith.mulf %121, %121 : vector<16x128xf32>
    %123 = arith.mulf %121, %122 : vector<16x128xf32>
    %cst_27 = arith.constant 4.471500e-02 : f32
    %124 = vector.broadcast %cst_27 : f32 to vector<16x128xf32>
    %125 = arith.mulf %124, %123 : vector<16x128xf32>
    %126 = arith.addf %121, %125 : vector<16x128xf32>
    %cst_28 = arith.constant 0.797884583 : f32
    %127 = vector.broadcast %cst_28 : f32 to vector<16x128xf32>
    %128 = arith.mulf %127, %126 : vector<16x128xf32>
    %129 = math.tanh %128 : vector<16x128xf32>
    %cst_29 = arith.constant 1.000000e+00 : f32
    %130 = vector.broadcast %cst_29 : f32 to vector<16x128xf32>
    %131 = arith.addf %130, %129 : vector<16x128xf32>
    %cst_30 = arith.constant 5.000000e-01 : f32
    %132 = vector.broadcast %cst_30 : f32 to vector<16x128xf32>
    %133 = arith.mulf %132, %131 : vector<16x128xf32>
    %134 = arith.mulf %121, %133 : vector<16x128xf32>
    %135 = arith.truncf %134 : vector<16x128xf32> to vector<16x128xbf16>
    %c0_31 = arith.constant 0 : index
    %c0_32 = arith.constant 0 : index
    %136 = vector.load %arg7[%c0_31, %c0_32] : memref<128x32xbf16, #tpu.memory_space<vmem>>, vector<128x32xbf16>
    %cst_33 = arith.constant dense<0.000000e+00> : vector<16x32xf32>
    %137 = tpu.matmul %135, %136, %cst_33 {dimension_numbers = #tpu.dot_dimension_numbers<[1], [0], [0], [1], [0, 0, 1, 1], [], []>} : vector<16x128xbf16>, vector<128x32xbf16>, vector<16x32xf32> -> vector<16x32xf32>
    %138 = vector.broadcast %7 : vector<1x32xf32> to vector<16x32xf32>
    %139 = arith.addf %137, %138 : vector<16x32xf32>
    %140 = arith.addf %94, %139 : vector<16x32xf32>
    %c0_34 = arith.constant 0 : index
    %c0_35 = arith.constant 0 : index
    %141 = vector.load %arg8[%c0_34, %c0_35] : memref<16x32xf32, #tpu.memory_space<vmem>>, vector<16x32xf32>
    tpu.vector_store %arg8[%c0_34, %c0_35], %140 {strides = array<i32>} : memref<16x32xf32, #tpu.memory_space<vmem>>, vector<16x32xf32>,
    return
  }
  func.func @transform_0(%arg0: i32) -> (i32, i32) {
    %c0_i32 = arith.constant 0 : i32
    %c0_i32_0 = arith.constant 0 : i32
    %c0_i32_1 = arith.constant 0 : i32
    return %c0_i32, %c0_i32_0 : i32, i32
  }
  func.func @transform_1(%arg0: i32) -> (i32, i32) {
    %c0_i32 = arith.constant 0 : i32
    %c0_i32_0 = arith.constant 0 : i32
    %c0_i32_1 = arith.constant 0 : i32
    return %c0_i32, %c0_i32_0 : i32, i32
  }
  func.func @transform_2(%arg0: i32) -> (i32, i32) {
    %c0_i32 = arith.constant 0 : i32
    %c0_i32_0 = arith.constant 0 : i32
    %c0_i32_1 = arith.constant 0 : i32
    return %c0_i32, %c0_i32_0 : i32, i32
  }
  func.func @transform_3(%arg0: i32) -> (i32, i32) {
    %c0_i32 = arith.constant 0 : i32
    %c0_i32_0 = arith.constant 0 : i32
    %c0_i32_1 = arith.constant 0 : i32
    return %c0_i32, %c0_i32_0 : i32, i32
  }
  func.func @transform_4(%arg0: i32) -> (i32, i32) {
    %c0_i32 = arith.constant 0 : i32
    %c0_i32_0 = arith.constant 0 : i32
    %c0_i32_1 = arith.constant 0 : i32
    return %c0_i32, %c0_i32_0 : i32, i32
  }
  func.func @transform_5(%arg0: i32) -> (i32, i32) {
    %c0_i32 = arith.constant 0 : i32
    %c0_i32_0 = arith.constant 0 : i32
    %c0_i32_1 = arith.constant 0 : i32
    return %c0_i32, %c0_i32_0 : i32, i32
  }
  func.func @transform_6(%arg0: i32) -> (i32, i32) {
    %c0_i32 = arith.constant 0 : i32
    %c0_i32_0 = arith.constant 0 : i32
    %c0_i32_1 = arith.constant 0 : i32
    return %c0_i32, %c0_i32_0 : i32, i32
  }
  func.func @transform_7(%arg0: i32) -> (i32, i32) {
    %c0_i32 = arith.constant 0 : i32
    %c0_i32_0 = arith.constant 0 : i32
    %c0_i32_1 = arith.constant 0 : i32
    return %c0_i32, %c0_i32_0 : i32, i32
  }
}

</mosaic_0001>

<llo_original>
// kernel: tpu_custom_call.1
$region0: #{tpu_custom_call.1}
  #allocation0 [shape = 'u32[]', space=smem, size = 0x4, offset = 0x4, fixed_abs, tag = 'smem constant byte address 0x4 - core index']
  #allocation1 [shape = 'u32[144,128]{1,0:T(1,128)}', space=vmem, size = 0x12000, scoped, tag = 'internal scratch']
  %s0 = inlined_call_operand.vmem [shape: f32[16,32], index: 0, kind: input, shape index: {}]
  %s1 = inlined_call_operand.vmem [shape: f32[8,128], index: 1, kind: input, shape index: {}]
  %s2 = inlined_call_operand.vmem [shape: f32[8,8], index: 2, kind: input, shape index: {}]
  %s3 = inlined_call_operand.vmem [shape: bf16[32,96], index: 3, kind: input, shape index: {}]
  %s4 = inlined_call_operand.vmem [shape: bf16[32,32], index: 4, kind: input, shape index: {}]
  %s5 = inlined_call_operand.vmem [shape: bf16[32,128], index: 5, kind: input, shape index: {}]
  %s6 = inlined_call_operand.vmem [shape: bf16[128,32], index: 6, kind: input, shape index: {}]
  %s7 = inlined_call_operand.hbm [shape: f32[16,32], index: 7, kind: output, shape index: {}]
  %s8 = sld [smem:[#allocation0]]
  $region38: #{tpu_custom_call.1} parent=0
    _
  %s10 = ssub.s32 1, %s8
  %s11 = scalar_select 0, %s10, %s8
  $region1: #{tpu_custom_call.1} parent=0
    #allocation2 [shape = 'u8[8192]{0}', space=vmem, size = 0x2000, scoped, tag = 'output window, operand 0, single buffered']
    #allocation3 [shape = 's32[1]{0}', space=sflag, size = 0x4, scoped, tag = 'scoped memory for tpu_custom_call.1']
    %12 = vsyncpa [#allocation3], 0
    // Predicated region
    $region2: #{tpu_custom_call.1} parent=1 // pred_check
      _
    $region3: #{tpu_custom_call.1} parent=1 // pred_check_branch
      %14 = sbr.rel (0) target = $region5
    $region4: #{tpu_custom_call.1} parent=1 // pred_region
      _
    $region5: #{tpu_custom_call.1} parent=1 // pred_fallthru
      _
    // Predicated region
    $region6: #{tpu_custom_call.1} parent=1 // pred_check
      _
    $region7: #{tpu_custom_call.1} parent=1 // pred_check_branch
      %16 = sbr.rel (0) target = $region9
    $region8: #{tpu_custom_call.1} parent=1 // pred_region
      _
    $region9: #{tpu_custom_call.1} parent=1 // pred_fallthru
      _
    // Predicated region
    $region10: #{tpu_custom_call.1} parent=1 // pred_check
      _
    $region11: #{tpu_custom_call.1} parent=1 // pred_check_branch
      %18 = sbr.rel (0) target = $region13
    $region12: #{tpu_custom_call.1} parent=1 // pred_region
      _
    $region13: #{tpu_custom_call.1} parent=1 // pred_fallthru
      _
    // Predicated region
    $region14: #{tpu_custom_call.1} parent=1 // pred_check
      _
    $region15: #{tpu_custom_call.1} parent=1 // pred_check_branch
      %20 = sbr.rel (0) target = $region17
    $region16: #{tpu_custom_call.1} parent=1 // pred_region
      _
    $region17: #{tpu_custom_call.1} parent=1 // pred_fallthru
      _
    // Predicated region
    $region18: #{tpu_custom_call.1} parent=1 // pred_check
      _
    $region19: #{tpu_custom_call.1} parent=1 // pred_check_branch
      %22 = sbr.rel (0) target = $region21
    $region20: #{tpu_custom_call.1} parent=1 // pred_region
      _
    $region21: #{tpu_custom_call.1} parent=1 // pred_fallthru
      _
    // Predicated region
    $region22: #{tpu_custom_call.1} parent=1 // pred_check
      _
    $region23: #{tpu_custom_call.1} parent=1 // pred_check_branch
      %24 = sbr.rel (0) target = $region25
    $region24: #{tpu_custom_call.1} parent=1 // pred_region
      _
    $region25: #{tpu_custom_call.1} parent=1 // pred_fallthru
      _
    // Predicated region
    $region26: #{tpu_custom_call.1} parent=1 // pred_check
      _
    $region27: #{tpu_custom_call.1} parent=1 // pred_check_branch
      %26 = sbr.rel (0) target = $region29
    $region28: #{tpu_custom_call.1} parent=1 // pred_region
      _
    $region29: #{tpu_custom_call.1} parent=1 // pred_fallthru
      _
    %v28 = vld [vmem:[%s0] sm:$0xff]
    %v29 = vld [vmem:[%s0 + $0x8] sm:$0xff]
    %v30 = vld [vmem:[%s1] sm:$0xff]
    %vm31 = vcmask 261120
    %v32 = vsel %vm31, %v28, 0.0
    %33 = vadd.xlane.f32.xlu0 %v32
    %v34 = vpop.xlane.xlu0 %33
    %v35 = vsel %vm31, %v29, 0.0
    %36 = vadd.xlane.f32.xlu0 %v35
    %v37 = vpop.xlane.xlu0 %36
    %v38 = vrcp.pop 32.0
    %v39 = vmul.f32 %v34, %v38
    %v40 = vmul.f32 %v37, %v38
    %v41 = vsub.f32 %v28, %v39
    %v42 = vsub.f32 %v29, %v40
    %v43 = vmul.f32 %v41, %v41
    %v44 = vmul.f32 %v42, %v42
    %v45 = vsel %vm31, %v43, 0.0
    %46 = vadd.xlane.f32.xlu0 %v45
    %v47 = vpop.xlane.xlu0 %46
    %v48 = vsel %vm31, %v44, 0.0
    %49 = vadd.xlane.f32.xlu0 %v48
    %v50 = vpop.xlane.xlu0 %49
    %v51 = vmul.f32 %v47, %v38
    %v52 = vmul.f32 %v50, %v38
    %v53 = vadd.f32 %v51, 1e-05
    %v54 = vadd.f32 %v52, 1e-05
    %v55 = vrsqrt.pop %v53
    %v56 = vrsqrt.pop %v54
    %v57 = vmul.f32 %v41, %v55
    %v58 = vmul.f32 %v42, %v56
    %v59 = vlaneseq
    %v60 = vshrl.u32 %v59, 7
    %v61 = vsub.s32 0, %v60
    %v62 = vrot.slane %v30, %v61
    %v63 = vmul.f32 %v57, %v62
    %v64 = vmul.f32 %v58, %v62
    %v65 = vlaneseq
    %v66 = vshrl.u32 %v65, 7
    %v67 = vsub.s32 1, %v66
    %v68 = vrot.slane %v30, %v67
    %v69 = vadd.f32 %v63, %v68
    %v70 = vadd.f32 %v64, %v68
    %v71 = vpack.c.bf16 %v70, %v69
    %v72 = vld [vmem:[%s3] sm:$0xf]
    %v73 = vld [vmem:[%s3 + $0x4] sm:$0xf]
    %v74 = vld [vmem:[%s3 + $0x8] sm:$0xf]
    %v75 = vld [vmem:[%s3 + $0xc] sm:$0xf]
    %v76 = vlaneseq
    %v77 = vshrl.u32 %v76, 7
    %v78 = vsub.s32 6, %v77
    %v79 = vrot.slane %v30, %v78
    %v84 = vunpack.c.l.b16 %v72
    %v85 = vunpack.c.l.b16 %v73
    %v86 = vunpack.c.l.b16 %v74
    %v87 = vunpack.c.l.b16 %v75
    %v88 = vpack.c.b16 %v85, %v84
    %v89 = vpack.c.b16 %v87, %v86
    %v93 = vsel %vm31, %v71, 0
    %95 = vmatprep.subr.bf16.mxu0 0
    %96 = vmatpush1.bf16.msra.mxu0 %v88
    %97 = vmatprep.subr.bf16.mxu0 0
    %98 = vmatpush1.bf16.msra.mxu0 %v89
    %99 = vmatprep.subr.bf16.mxu0 0
    %100 = vmatpush1.bf16.msra.mxu0 0
    %101 = vmatprep.subr.bf16.mxu0 0
    %102 = vmatpush1.bf16.msra.mxu0 0
    %103 = vmatprep.subr.bf16.mxu0 0
    %104 = vmatpush1.bf16.msra.mxu0 0
    %105 = vmatprep.subr.bf16.mxu0 0
    %106 = vmatpush1.bf16.msra.mxu0 0
    %107 = vmatprep.subr.bf16.mxu0 0
    %108 = vmatpush1.bf16.msra.mxu0 0
    %109 = vmatprep.subr.bf16.mxu0 0
    %110 = vmatpush1.bf16.msra.mxu0 0
    %111 = vmatprep.subr.bf16.mxu0 0
    %112 = vmatpush1.bf16.msra.mxu0 0
    %113 = vmatprep.subr.bf16.mxu0 0
    %114 = vmatpush1.bf16.msra.mxu0 0
    %115 = vmatprep.subr.bf16.mxu0 0
    %116 = vmatpush1.bf16.msra.mxu0 0
    %117 = vmatprep.subr.bf16.mxu0 0
    %118 = vmatpush1.bf16.msra.mxu0 0
    %119 = vmatprep.subr.bf16.mxu0 0
    %120 = vmatpush1.bf16.msra.mxu0 0
    %121 = vmatprep.subr.bf16.mxu0 0
    %122 = vmatpush1.bf16.msra.mxu0 0
    %123 = vmatprep.subr.bf16.mxu0 0
    %124 = vmatpush1.bf16.msra.mxu0 0
    %125 = vmatprep.subr.bf16.mxu0 0
    %126 = vmatpush1.bf16.msra.mxu0 0
    %127 = vmatprep.mubr.bf16.mxu0 0
    %128 = vmatmul.mubr.bf16.gmra.mrb[0].mxu0 %v93
    %v129 = vpop.f32.mrb[0].mxu0
    %v130 = vadd.f32 %v79, %v129
    %v131 = vpop.f32.mrb[0].mxu0
    %v132 = vpop.f32.mrb[0].mxu0
    %v133 = vadd.f32 %v79, %v132
    %v134 = vpop.f32.mrb[0].mxu0
    %135 = vdwg.mxu0
    %138 = vrot.lane.b32.xlu0 %v130, 120
    %v139 = vpop.permute.xlu0 %138
    %140 = vrot.lane.b32.xlu0 %v133, 120
    %v141 = vpop.permute.xlu0 %140
    %142 = vrot.lane.b32.xlu0 %v130, 112
    %v143 = vpop.permute.xlu0 %142
    %144 = vrot.lane.b32.xlu0 %v133, 112
    %v145 = vpop.permute.xlu0 %144
    %146 = vrot.lane.b32.xlu0 %v130, 104
    %v147 = vpop.permute.xlu0 %146
    %148 = vrot.lane.b32.xlu0 %v133, 104
    %v149 = vpop.permute.xlu0 %148
    %v150 = vld [vmem:[%s2] sm:$0xff]
    %151 = vrot.lane.b32.xlu0 %v130, 96
    %v152 = vpop.permute.xlu0 %151
    %vm153 = vcmask 64512
    %v154 = vsel %vm153, %v130, 0
    %v156 = vsel %vm153, %v152, 0
    %158 = vmatprep.subr.mxu0 0.0
    %159 = vmatpush1.xpose.msra.mxu0 %v156
    %160 = vmatprep.subr.mxu0 0.0
    %161 = vmatpush1.xpose.msra.mxu0 0.0
    %162 = vmatprep.subr.mxu0 0.0
    %163 = vmatpush1.xpose.msra.mxu0 0.0
    %164 = vmatprep.subr.mxu0 0.0
    %165 = vmatpush1.xpose.msra.mxu0 0.0
    %166 = vmatprep.subr.mxu0 0.0
    %167 = vmatpush1.xpose.msra.mxu0 0.0
    %168 = vmatprep.subr.mxu0 0.0
    %169 = vmatpush1.xpose.msra.mxu0 0.0
    %170 = vmatprep.subr.mxu0 0.0
    %171 = vmatpush1.xpose.msra.mxu0 0.0
    %172 = vmatprep.subr.mxu0 0.0
    %173 = vmatpush1.xpose.msra.mxu0 0.0
    %174 = vmatprep.subr.mxu0 0.0
    %175 = vmatpush1.xpose.msra.mxu0 0.0
    %176 = vmatprep.subr.mxu0 0.0
    %177 = vmatpush1.xpose.msra.mxu0 0.0
    %178 = vmatprep.subr.mxu0 0.0
    %179 = vmatpush1.xpose.msra.mxu0 0.0
    %180 = vmatprep.subr.mxu0 0.0
    %181 = vmatpush1.xpose.msra.mxu0 0.0
    %182 = vmatprep.subr.mxu0 0.0
    %183 = vmatpush1.xpose.msra.mxu0 0.0
    %184 = vmatprep.subr.mxu0 0.0
    %185 = vmatpush1.xpose.msra.mxu0 0.0
    %186 = vmatprep.subr.mxu0 0.0
    %187 = vmatpush1.xpose.msra.mxu0 0.0
    %188 = vmatprep.subr.mxu0 0.0
    %189 = vmatpush1.xpose.msra.mxu0 0.0
    %190 = vmatprep.subr.mxu0 0.0
    %191 = vmatpush1.xpose.msra.mxu0 0.0
    %192 = vmatprep.subr.mxu0 0.0
    %193 = vmatpush1.xpose.msra.mxu0 0.0
    %194 = vmatprep.subr.mxu0 0.0
    %195 = vmatpush1.xpose.msra.mxu0 0.0
    %196 = vmatprep.subr.mxu0 0.0
    %197 = vmatpush1.xpose.msra.mxu0 0.0
    %198 = vmatprep.subr.mxu0 0.0
    %199 = vmatpush1.xpose.msra.mxu0 0.0
    %200 = vmatprep.subr.mxu0 0.0
    %201 = vmatpush1.xpose.msra.mxu0 0.0
    %202 = vmatprep.subr.mxu0 0.0
    %203 = vmatpush1.xpose.msra.mxu0 0.0
    %204 = vmatprep.subr.mxu0 0.0
    %205 = vmatpush1.xpose.msra.mxu0 0.0
    %206 = vmatprep.subr.mxu0 0.0
    %207 = vmatpush1.xpose.msra.mxu0 0.0
    %208 = vmatprep.subr.mxu0 0.0
    %209 = vmatpush1.xpose.msra.mxu0 0.0
    %210 = vmatprep.subr.mxu0 0.0
    %211 = vmatpush1.xpose.msra.mxu0 0.0
    %212 = vmatprep.subr.mxu0 0.0
    %213 = vmatpush1.xpose.msra.mxu0 0.0
    %214 = vmatprep.subr.mxu0 0.0
    %215 = vmatpush1.xpose.msra.mxu0 0.0
    %216 = vmatprep.subr.mxu0 0.0
    %217 = vmatpush1.xpose.msra.mxu0 0.0
    %218 = vmatprep.subr.mxu0 0.0
    %219 = vmatpush1.xpose.msra.mxu0 0.0
    %220 = vmatprep.subr.mxu0 0.0
    %221 = vmatpush1.xpose.msra.mxu0 0.0
    %222 = vmatprep.mubr.f32.mxu0 0.0
    %223 = vmatmul.mubr.f32.gmra.mrb[0].mxu0 %v154
    %v224 = vpop.f32.mrb[0].mxu0
    %v225 = vadd.f32 %v150, %v224
    %v226 = vpop.f32.mrb[0].mxu0
    %227 = vdwg.mxu0
    %228 = vrot.lane.b32.xlu0 %v133, 96
    %v229 = vpop.permute.xlu0 %228
    %v230 = vsel %vm153, %v133, 0
    %v232 = vsel %vm153, %v229, 0
    %234 = vmatprep.subr.mxu0 0.0
    %235 = vmatpush1.xpose.msra.mxu0 %v232
    %236 = vmatprep.subr.mxu0 0.0
    %237 = vmatpush1.xpose.msra.mxu0 0.0
    %238 = vmatprep.subr.mxu0 0.0
    %239 = vmatpush1.xpose.msra.mxu0 0.0
    %240 = vmatprep.subr.mxu0 0.0
    %241 = vmatpush1.xpose.msra.mxu0 0.0
    %242 = vmatprep.subr.mxu0 0.0
    %243 = vmatpush1.xpose.msra.mxu0 0.0
    %244 = vmatprep.subr.mxu0 0.0
    %245 = vmatpush1.xpose.msra.mxu0 0.0
    %246 = vmatprep.subr.mxu0 0.0
    %247 = vmatpush1.xpose.msra.mxu0 0.0
    %248 = vmatprep.subr.mxu0 0.0
    %249 = vmatpush1.xpose.msra.mxu0 0.0
    %250 = vmatprep.subr.mxu0 0.0
    %251 = vmatpush1.xpose.msra.mxu0 0.0
    %252 = vmatprep.subr.mxu0 0.0
    %253 = vmatpush1.xpose.msra.mxu0 0.0
    %254 = vmatprep.subr.mxu0 0.0
    %255 = vmatpush1.xpose.msra.mxu0 0.0
    %256 = vmatprep.subr.mxu0 0.0
    %257 = vmatpush1.xpose.msra.mxu0 0.0
    %258 = vmatprep.subr.mxu0 0.0
    %259 = vmatpush1.xpose.msra.mxu0 0.0
    %260 = vmatprep.subr.mxu0 0.0
    %261 = vmatpush1.xpose.msra.mxu0 0.0
    %262 = vmatprep.subr.mxu0 0.0
    %263 = vmatpush1.xpose.msra.mxu0 0.0
    %264 = vmatprep.subr.mxu0 0.0
    %265 = vmatpush1.xpose.msra.mxu0 0.0
    %266 = vmatprep.subr.mxu0 0.0
    %267 = vmatpush1.xpose.msra.mxu0 0.0
    %268 = vmatprep.subr.mxu0 0.0
    %269 = vmatpush1.xpose.msra.mxu0 0.0
    %270 = vmatprep.subr.mxu0 0.0
    %271 = vmatpush1.xpose.msra.mxu0 0.0
    %272 = vmatprep.subr.mxu0 0.0
    %273 = vmatpush1.xpose.msra.mxu0 0.0
    %274 = vmatprep.subr.mxu0 0.0
    %275 = vmatpush1.xpose.msra.mxu0 0.0
    %276 = vmatprep.subr.mxu0 0.0
    %277 = vmatpush1.xpose.msra.mxu0 0.0
    %278 = vmatprep.subr.mxu0 0.0
    %279 = vmatpush1.xpose.msra.mxu0 0.0
    %280 = vmatprep.subr.mxu0 0.0
    %281 = vmatpush1.xpose.msra.mxu0 0.0
    %282 = vmatprep.subr.mxu0 0.0
    %283 = vmatpush1.xpose.msra.mxu0 0.0
    %284 = vmatprep.subr.mxu0 0.0
    %285 = vmatpush1.xpose.msra.mxu0 0.0
    %286 = vmatprep.subr.mxu0 0.0
    %287 = vmatpush1.xpose.msra.mxu0 0.0
    %288 = vmatprep.subr.mxu0 0.0
    %289 = vmatpush1.xpose.msra.mxu0 0.0
    %290 = vmatprep.subr.mxu0 0.0
    %291 = vmatpush1.xpose.msra.mxu0 0.0
    %292 = vmatprep.subr.mxu0 0.0
    %293 = vmatpush1.xpose.msra.mxu0 0.0
    %294 = vmatprep.subr.mxu0 0.0
    %295 = vmatpush1.xpose.msra.mxu0 0.0
    %296 = vmatprep.subr.mxu0 0.0
    %297 = vmatpush1.xpose.msra.mxu0 0.0
    %298 = vmatprep.mubr.f32.mxu0 0.0
    %299 = vmatmul.mubr.f32.gmra.mrb[0].mxu0 %v230
    %v300 = vpop.f32.mrb[0].mxu0
    %v301 = vadd.f32 %v150, %v300
    %v302 = vpop.f32.mrb[0].mxu0
    %303 = vdwg.mxu0
    %304 = vrot.lane.b32.xlu0 %v139, 96
    %v305 = vpop.permute.xlu0 %304
    %v306 = vsel %vm153, %v139, 0
    %v308 = vsel %vm153, %v305, 0
    %310 = vmatprep.subr.mxu0 0.0
    %311 = vmatpush1.xpose.msra.mxu0 %v308
    %312 = vmatprep.subr.mxu0 0.0
    %313 = vmatpush1.xpose.msra.mxu0 0.0
    %314 = vmatprep.subr.mxu0 0.0
    %315 = vmatpush1.xpose.msra.mxu0 0.0
    %316 = vmatprep.subr.mxu0 0.0
    %317 = vmatpush1.xpose.msra.mxu0 0.0
    %318 = vmatprep.subr.mxu0 0.0
    %319 = vmatpush1.xpose.msra.mxu0 0.0
    %320 = vmatprep.subr.mxu0 0.0
    %321 = vmatpush1.xpose.msra.mxu0 0.0
    %322 = vmatprep.subr.mxu0 0.0
    %323 = vmatpush1.xpose.msra.mxu0 0.0
    %324 = vmatprep.subr.mxu0 0.0
    %325 = vmatpush1.xpose.msra.mxu0 0.0
    %326 = vmatprep.subr.mxu0 0.0
    %327 = vmatpush1.xpose.msra.mxu0 0.0
    %328 = vmatprep.subr.mxu0 0.0
    %329 = vmatpush1.xpose.msra.mxu0 0.0
    %330 = vmatprep.subr.mxu0 0.0
    %331 = vmatpush1.xpose.msra.mxu0 0.0
    %332 = vmatprep.subr.mxu0 0.0
    %333 = vmatpush1.xpose.msra.mxu0 0.0
    %334 = vmatprep.subr.mxu0 0.0
    %335 = vmatpush1.xpose.msra.mxu0 0.0
    %336 = vmatprep.subr.mxu0 0.0
    %337 = vmatpush1.xpose.msra.mxu0 0.0
    %338 = vmatprep.subr.mxu0 0.0
    %339 = vmatpush1.xpose.msra.mxu0 0.0
    %340 = vmatprep.subr.mxu0 0.0
    %341 = vmatpush1.xpose.msra.mxu0 0.0
    %342 = vmatprep.subr.mxu0 0.0
    %343 = vmatpush1.xpose.msra.mxu0 0.0
    %344 = vmatprep.subr.mxu0 0.0
    %345 = vmatpush1.xpose.msra.mxu0 0.0
    %346 = vmatprep.subr.mxu0 0.0
    %347 = vmatpush1.xpose.msra.mxu0 0.0
    %348 = vmatprep.subr.mxu0 0.0
    %349 = vmatpush1.xpose.msra.mxu0 0.0
    %350 = vmatprep.subr.mxu0 0.0
    %351 = vmatpush1.xpose.msra.mxu0 0.0
    %352 = vmatprep.subr.mxu0 0.0
    %353 = vmatpush1.xpose.msra.mxu0 0.0
    %354 = vmatprep.subr.mxu0 0.0
    %355 = vmatpush1.xpose.msra.mxu0 0.0
    %356 = vmatprep.subr.mxu0 0.0
    %357 = vmatpush1.xpose.msra.mxu0 0.0
    %358 = vmatprep.subr.mxu0 0.0
    %359 = vmatpush1.xpose.msra.mxu0 0.0
    %360 = vmatprep.subr.mxu0 0.0
    %361 = vmatpush1.xpose.msra.mxu0 0.0
    %362 = vmatprep.subr.mxu0 0.0
    %363 = vmatpush1.xpose.msra.mxu0 0.0
    %364 = vmatprep.subr.mxu0 0.0
    %365 = vmatpush1.xpose.msra.mxu0 0.0
    %366 = vmatprep.subr.mxu0 0.0
    %367 = vmatpush1.xpose.msra.mxu0 0.0
    %368 = vmatprep.subr.mxu0 0.0
    %369 = vmatpush1.xpose.msra.mxu0 0.0
    %370 = vmatprep.subr.mxu0 0.0
    %371 = vmatpush1.xpose.msra.mxu0 0.0
    %372 = vmatprep.subr.mxu0 0.0
    %373 = vmatpush1.xpose.msra.mxu0 0.0
    %374 = vmatprep.mubr.f32.mxu0 0.0
    %375 = vmatmul.mubr.f32.gmra.mrb[0].mxu0 %v306
    %v376 = vpop.f32.mrb[0].mxu0
    %v377 = vadd.f32 %v150, %v376
    %v378 = vpop.f32.mrb[0].mxu0
    %379 = vdwg.mxu0
    %380 = vrot.lane.b32.xlu0 %v141, 96
    %v381 = vpop.permute.xlu0 %380
    %v382 = vsel %vm153, %v141, 0
    %v384 = vsel %vm153, %v381, 0
    %386 = vmatprep.subr.mxu0 0.0
    %387 = vmatpush1.xpose.msra.mxu0 %v384
    %388 = vmatprep.subr.mxu0 0.0
    %389 = vmatpush1.xpose.msra.mxu0 0.0
    %390 = vmatprep.subr.mxu0 0.0
    %391 = vmatpush1.xpose.msra.mxu0 0.0
    %392 = vmatprep.subr.mxu0 0.0
    %393 = vmatpush1.xpose.msra.mxu0 0.0
    %394 = vmatprep.subr.mxu0 0.0
    %395 = vmatpush1.xpose.msra.mxu0 0.0
    %396 = vmatprep.subr.mxu0 0.0
    %397 = vmatpush1.xpose.msra.mxu0 0.0
    %398 = vmatprep.subr.mxu0 0.0
    %399 = vmatpush1.xpose.msra.mxu0 0.0
    %400 = vmatprep.subr.mxu0 0.0
    %401 = vmatpush1.xpose.msra.mxu0 0.0
    %402 = vmatprep.subr.mxu0 0.0
    %403 = vmatpush1.xpose.msra.mxu0 0.0
    %404 = vmatprep.subr.mxu0 0.0
    %405 = vmatpush1.xpose.msra.mxu0 0.0
    %406 = vmatprep.subr.mxu0 0.0
    %407 = vmatpush1.xpose.msra.mxu0 0.0
    %408 = vmatprep.subr.mxu0 0.0
    %409 = vmatpush1.xpose.msra.mxu0 0.0
    %410 = vmatprep.subr.mxu0 0.0
    %411 = vmatpush1.xpose.msra.mxu0 0.0
    %412 = vmatprep.subr.mxu0 0.0
    %413 = vmatpush1.xpose.msra.mxu0 0.0
    %414 = vmatprep.subr.mxu0 0.0
    %415 = vmatpush1.xpose.msra.mxu0 0.0
    %416 = vmatprep.subr.mxu0 0.0
    %417 = vmatpush1.xpose.msra.mxu0 0.0
    %418 = vmatprep.subr.mxu0 0.0
    %419 = vmatpush1.xpose.msra.mxu0 0.0
    %420 = vmatprep.subr.mxu0 0.0
    %421 = vmatpush1.xpose.msra.mxu0 0.0
    %422 = vmatprep.subr.mxu0 0.0
    %423 = vmatpush1.xpose.msra.mxu0 0.0
    %424 = vmatprep.subr.mxu0 0.0
    %425 = vmatpush1.xpose.msra.mxu0 0.0
    %426 = vmatprep.subr.mxu0 0.0
    %427 = vmatpush1.xpose.msra.mxu0 0.0
    %428 = vmatprep.subr.mxu0 0.0
    %429 = vmatpush1.xpose.msra.mxu0 0.0
    %430 = vmatprep.subr.mxu0 0.0
    %431 = vmatpush1.xpose.msra.mxu0 0.0
    %432 = vmatprep.subr.mxu0 0.0
    %433 = vmatpush1.xpose.msra.mxu0 0.0
    %434 = vmatprep.subr.mxu0 0.0
    %435 = vmatpush1.xpose.msra.mxu0 0.0
    %436 = vmatprep.subr.mxu0 0.0
    %437 = vmatpush1.xpose.msra.mxu0 0.0
    %438 = vmatprep.subr.mxu0 0.0
    %439 = vmatpush1.xpose.msra.mxu0 0.0
    %440 = vmatprep.subr.mxu0 0.0
    %441 = vmatpush1.xpose.msra.mxu0 0.0
    %442 = vmatprep.subr.mxu0 0.0
    %443 = vmatpush1.xpose.msra.mxu0 0.0
    %444 = vmatprep.subr.mxu0 0.0
    %445 = vmatpush1.xpose.msra.mxu0 0.0
    %446 = vmatprep.subr.mxu0 0.0
    %447 = vmatpush1.xpose.msra.mxu0 0.0
    %448 = vmatprep.subr.mxu0 0.0
    %449 = vmatpush1.xpose.msra.mxu0 0.0
    %450 = vmatprep.mubr.f32.mxu0 0.0
    %451 = vmatmul.mubr.f32.gmra.mrb[0].mxu0 %v382
    %v452 = vpop.f32.mrb[0].mxu0
    %v453 = vadd.f32 %v150, %v452
    %v454 = vpop.f32.mrb[0].mxu0
    %455 = vdwg.mxu0
    %456 = vrot.lane.b32.xlu0 %v143, 96
    %v457 = vpop.permute.xlu0 %456
    %v458 = vsel %vm153, %v143, 0
    %v460 = vsel %vm153, %v457, 0
    %462 = vmatprep.subr.mxu0 0.0
    %463 = vmatpush1.xpose.msra.mxu0 %v460
    %464 = vmatprep.subr.mxu0 0.0
    %465 = vmatpush1.xpose.msra.mxu0 0.0
    %466 = vmatprep.subr.mxu0 0.0
    %467 = vmatpush1.xpose.msra.mxu0 0.0
    %468 = vmatprep.subr.mxu0 0.0
    %469 = vmatpush1.xpose.msra.mxu0 0.0
    %470 = vmatprep.subr.mxu0 0.0
    %471 = vmatpush1.xpose.msra.mxu0 0.0
    %472 = vmatprep.subr.mxu0 0.0
    %473 = vmatpush1.xpose.msra.mxu0 0.0
    %474 = vmatprep.subr.mxu0 0.0
    %475 = vmatpush1.xpose.msra.mxu0 0.0
    %476 = vmatprep.subr.mxu0 0.0
    %477 = vmatpush1.xpose.msra.mxu0 0.0
    %478 = vmatprep.subr.mxu0 0.0
    %479 = vmatpush1.xpose.msra.mxu0 0.0
    %480 = vmatprep.subr.mxu0 0.0
    %481 = vmatpush1.xpose.msra.mxu0 0.0
    %482 = vmatprep.subr.mxu0 0.0
    %483 = vmatpush1.xpose.msra.mxu0 0.0
    %484 = vmatprep.subr.mxu0 0.0
    %485 = vmatpush1.xpose.msra.mxu0 0.0
    %486 = vmatprep.subr.mxu0 0.0
    %487 = vmatpush1.xpose.msra.mxu0 0.0
    %488 = vmatprep.subr.mxu0 0.0
    %489 = vmatpush1.xpose.msra.mxu0 0.0
    %490 = vmatprep.subr.mxu0 0.0
    %491 = vmatpush1.xpose.msra.mxu0 0.0
    %492 = vmatprep.subr.mxu0 0.0
    %493 = vmatpush1.xpose.msra.mxu0 0.0
    %494 = vmatprep.subr.mxu0 0.0
    %495 = vmatpush1.xpose.msra.mxu0 0.0
    %496 = vmatprep.subr.mxu0 0.0
    %497 = vmatpush1.xpose.msra.mxu0 0.0
    %498 = vmatprep.subr.mxu0 0.0
    %499 = vmatpush1.xpose.msra.mxu0 0.0
    %500 = vmatprep.subr.mxu0 0.0
    %501 = vmatpush1.xpose.msra.mxu0 0.0
    %502 = vmatprep.subr.mxu0 0.0
    %503 = vmatpush1.xpose.msra.mxu0 0.0
    %504 = vmatprep.subr.mxu0 0.0
    %505 = vmatpush1.xpose.msra.mxu0 0.0
    %506 = vmatprep.subr.mxu0 0.0
    %507 = vmatpush1.xpose.msra.mxu0 0.0
    %508 = vmatprep.subr.mxu0 0.0
    %509 = vmatpush1.xpose.msra.mxu0 0.0
    %510 = vmatprep.subr.mxu0 0.0
    %511 = vmatpush1.xpose.msra.mxu0 0.0
    %512 = vmatprep.subr.mxu0 0.0
    %513 = vmatpush1.xpose.msra.mxu0 0.0
    %514 = vmatprep.subr.mxu0 0.0
    %515 = vmatpush1.xpose.msra.mxu0 0.0
    %516 = vmatprep.subr.mxu0 0.0
    %517 = vmatpush1.xpose.msra.mxu0 0.0
    %518 = vmatprep.subr.mxu0 0.0
    %519 = vmatpush1.xpose.msra.mxu0 0.0
    %520 = vmatprep.subr.mxu0 0.0
    %521 = vmatpush1.xpose.msra.mxu0 0.0
    %522 = vmatprep.subr.mxu0 0.0
    %523 = vmatpush1.xpose.msra.mxu0 0.0
    %524 = vmatprep.subr.mxu0 0.0
    %525 = vmatpush1.xpose.msra.mxu0 0.0
    %526 = vmatprep.mubr.f32.mxu0 0.0
    %527 = vmatmul.mubr.f32.gmra.mrb[0].mxu0 %v458
    %v528 = vpop.f32.mrb[0].mxu0
    %v529 = vadd.f32 %v150, %v528
    %v530 = vpop.f32.mrb[0].mxu0
    %531 = vdwg.mxu0
    %532 = vrot.lane.b32.xlu0 %v145, 96
    %v533 = vpop.permute.xlu0 %532
    %v534 = vsel %vm153, %v145, 0
    %v536 = vsel %vm153, %v533, 0
    %538 = vmatprep.subr.mxu0 0.0
    %539 = vmatpush1.xpose.msra.mxu0 %v536
    %540 = vmatprep.subr.mxu0 0.0
    %541 = vmatpush1.xpose.msra.mxu0 0.0
    %542 = vmatprep.subr.mxu0 0.0
    %543 = vmatpush1.xpose.msra.mxu0 0.0
    %544 = vmatprep.subr.mxu0 0.0
    %545 = vmatpush1.xpose.msra.mxu0 0.0
    %546 = vmatprep.subr.mxu0 0.0
    %547 = vmatpush1.xpose.msra.mxu0 0.0
    %548 = vmatprep.subr.mxu0 0.0
    %549 = vmatpush1.xpose.msra.mxu0 0.0
    %550 = vmatprep.subr.mxu0 0.0
    %551 = vmatpush1.xpose.msra.mxu0 0.0
    %552 = vmatprep.subr.mxu0 0.0
    %553 = vmatpush1.xpose.msra.mxu0 0.0
    %554 = vmatprep.subr.mxu0 0.0
    %555 = vmatpush1.xpose.msra.mxu0 0.0
    %556 = vmatprep.subr.mxu0 0.0
    %557 = vmatpush1.xpose.msra.mxu0 0.0
    %558 = vmatprep.subr.mxu0 0.0
    %559 = vmatpush1.xpose.msra.mxu0 0.0
    %560 = vmatprep.subr.mxu0 0.0
    %561 = vmatpush1.xpose.msra.mxu0 0.0
    %562 = vmatprep.subr.mxu0 0.0
    %563 = vmatpush1.xpose.msra.mxu0 0.0
    %564 = vmatprep.subr.mxu0 0.0
    %565 = vmatpush1.xpose.msra.mxu0 0.0
    %566 = vmatprep.subr.mxu0 0.0
    %567 = vmatpush1.xpose.msra.mxu0 0.0
    %568 = vmatprep.subr.mxu0 0.0
    %569 = vmatpush1.xpose.msra.mxu0 0.0
    %570 = vmatprep.subr.mxu0 0.0
    %571 = vmatpush1.xpose.msra.mxu0 0.0
    %572 = vmatprep.subr.mxu0 0.0
    %573 = vmatpush1.xpose.msra.mxu0 0.0
    %574 = vmatprep.subr.mxu0 0.0
    %575 = vmatpush1.xpose.msra.mxu0 0.0
    %576 = vmatprep.subr.mxu0 0.0
    %577 = vmatpush1.xpose.msra.mxu0 0.0
    %578 = vmatprep.subr.mxu0 0.0
    %579 = vmatpush1.xpose.msra.mxu0 0.0
    %580 = vmatprep.subr.mxu0 0.0
    %581 = vmatpush1.xpose.msra.mxu0 0.0
    %582 = vmatprep.subr.mxu0 0.0
    %583 = vmatpush1.xpose.msra.mxu0 0.0
    %584 = vmatprep.subr.mxu0 0.0
    %585 = vmatpush1.xpose.msra.mxu0 0.0
    %586 = vmatprep.subr.mxu0 0.0
    %587 = vmatpush1.xpose.msra.mxu0 0.0
    %588 = vmatprep.subr.mxu0 0.0
    %589 = vmatpush1.xpose.msra.mxu0 0.0
    %590 = vmatprep.subr.mxu0 0.0
    %591 = vmatpush1.xpose.msra.mxu0 0.0
    %592 = vmatprep.subr.mxu0 0.0
    %593 = vmatpush1.xpose.msra.mxu0 0.0
    %594 = vmatprep.subr.mxu0 0.0
    %595 = vmatpush1.xpose.msra.mxu0 0.0
    %596 = vmatprep.subr.mxu0 0.0
    %597 = vmatpush1.xpose.msra.mxu0 0.0
    %598 = vmatprep.subr.mxu0 0.0
    %599 = vmatpush1.xpose.msra.mxu0 0.0
    %600 = vmatprep.subr.mxu0 0.0
    %601 = vmatpush1.xpose.msra.mxu0 0.0
    %602 = vmatprep.mubr.f32.mxu0 0.0
    %603 = vmatmul.mubr.f32.gmra.mrb[0].mxu0 %v534
    %v604 = vpop.f32.mrb[0].mxu0
    %v605 = vadd.f32 %v150, %v604
    %v606 = vpop.f32.mrb[0].mxu0
    %607 = vdwg.mxu0
    %608 = vrot.lane.b32.xlu0 %v147, 96
    %v609 = vpop.permute.xlu0 %608
    %v610 = vsel %vm153, %v147, 0
    %v612 = vsel %vm153, %v609, 0
    %614 = vmatprep.subr.mxu0 0.0
    %615 = vmatpush1.xpose.msra.mxu0 %v612
    %616 = vmatprep.subr.mxu0 0.0
    %617 = vmatpush1.xpose.msra.mxu0 0.0
    %618 = vmatprep.subr.mxu0 0.0
    %619 = vmatpush1.xpose.msra.mxu0 0.0
    %620 = vmatprep.subr.mxu0 0.0
    %621 = vmatpush1.xpose.msra.mxu0 0.0
    %622 = vmatprep.subr.mxu0 0.0
    %623 = vmatpush1.xpose.msra.mxu0 0.0
    %624 = vmatprep.subr.mxu0 0.0
    %625 = vmatpush1.xpose.msra.mxu0 0.0
    %626 = vmatprep.subr.mxu0 0.0
    %627 = vmatpush1.xpose.msra.mxu0 0.0
    %628 = vmatprep.subr.mxu0 0.0
    %629 = vmatpush1.xpose.msra.mxu0 0.0
    %630 = vmatprep.subr.mxu0 0.0
    %631 = vmatpush1.xpose.msra.mxu0 0.0
    %632 = vmatprep.subr.mxu0 0.0
    %633 = vmatpush1.xpose.msra.mxu0 0.0
    %634 = vmatprep.subr.mxu0 0.0
    %635 = vmatpush1.xpose.msra.mxu0 0.0
    %636 = vmatprep.subr.mxu0 0.0
    %637 = vmatpush1.xpose.msra.mxu0 0.0
    %638 = vmatprep.subr.mxu0 0.0
    %639 = vmatpush1.xpose.msra.mxu0 0.0
    %640 = vmatprep.subr.mxu0 0.0
    %641 = vmatpush1.xpose.msra.mxu0 0.0
    %642 = vmatprep.subr.mxu0 0.0
    %643 = vmatpush1.xpose.msra.mxu0 0.0
    %644 = vmatprep.subr.mxu0 0.0
    %645 = vmatpush1.xpose.msra.mxu0 0.0
    %646 = vmatprep.subr.mxu0 0.0
    %647 = vmatpush1.xpose.msra.mxu0 0.0
    %648 = vmatprep.subr.mxu0 0.0
    %649 = vmatpush1.xpose.msra.mxu0 0.0
    %650 = vmatprep.subr.mxu0 0.0
    %651 = vmatpush1.xpose.msra.mxu0 0.0
    %652 = vmatprep.subr.mxu0 0.0
    %653 = vmatpush1.xpose.msra.mxu0 0.0
    %654 = vmatprep.subr.mxu0 0.0
    %655 = vmatpush1.xpose.msra.mxu0 0.0
    %656 = vmatprep.subr.mxu0 0.0
    %657 = vmatpush1.xpose.msra.mxu0 0.0
    %658 = vmatprep.subr.mxu0 0.0
    %659 = vmatpush1.xpose.msra.mxu0 0.0
    %660 = vmatprep.subr.mxu0 0.0
    %661 = vmatpush1.xpose.msra.mxu0 0.0
    %662 = vmatprep.subr.mxu0 0.0
    %663 = vmatpush1.xpose.msra.mxu0 0.0
    %664 = vmatprep.subr.mxu0 0.0
    %665 = vmatpush1.xpose.msra.mxu0 0.0
    %666 = vmatprep.subr.mxu0 0.0
    %667 = vmatpush1.xpose.msra.mxu0 0.0
    %668 = vmatprep.subr.mxu0 0.0
    %669 = vmatpush1.xpose.msra.mxu0 0.0
    %670 = vmatprep.subr.mxu0 0.0
    %671 = vmatpush1.xpose.msra.mxu0 0.0
    %672 = vmatprep.subr.mxu0 0.0
    %673 = vmatpush1.xpose.msra.mxu0 0.0
    %674 = vmatprep.subr.mxu0 0.0
    %675 = vmatpush1.xpose.msra.mxu0 0.0
    %676 = vmatprep.subr.mxu0 0.0
    %677 = vmatpush1.xpose.msra.mxu0 0.0
    %678 = vmatprep.mubr.f32.mxu0 0.0
    %679 = vmatmul.mubr.f32.gmra.mrb[0].mxu0 %v610
    %v680 = vpop.f32.mrb[0].mxu0
    %v681 = vadd.f32 %v150, %v680
    %v682 = vpop.f32.mrb[0].mxu0
    %683 = vdwg.mxu0
    %684 = vrot.lane.b32.xlu0 %v149, 96
    %v685 = vpop.permute.xlu0 %684
    %v686 = vsel %vm153, %v149, 0
    %v688 = vsel %vm153, %v685, 0
    %690 = vmatprep.subr.mxu0 0.0
    %691 = vmatpush1.xpose.msra.mxu0 %v688
    %692 = vmatprep.subr.mxu0 0.0
    %693 = vmatpush1.xpose.msra.mxu0 0.0
    %694 = vmatprep.subr.mxu0 0.0
    %695 = vmatpush1.xpose.msra.mxu0 0.0
    %696 = vmatprep.subr.mxu0 0.0
    %697 = vmatpush1.xpose.msra.mxu0 0.0
    %698 = vmatprep.subr.mxu0 0.0
    %699 = vmatpush1.xpose.msra.mxu0 0.0
    %700 = vmatprep.subr.mxu0 0.0
    %701 = vmatpush1.xpose.msra.mxu0 0.0
    %702 = vmatprep.subr.mxu0 0.0
    %703 = vmatpush1.xpose.msra.mxu0 0.0
    %704 = vmatprep.subr.mxu0 0.0
    %705 = vmatpush1.xpose.msra.mxu0 0.0
    %706 = vmatprep.subr.mxu0 0.0
    %707 = vmatpush1.xpose.msra.mxu0 0.0
    %708 = vmatprep.subr.mxu0 0.0
    %709 = vmatpush1.xpose.msra.mxu0 0.0
    %710 = vmatprep.subr.mxu0 0.0
    %711 = vmatpush1.xpose.msra.mxu0 0.0
    %712 = vmatprep.subr.mxu0 0.0
    %713 = vmatpush1.xpose.msra.mxu0 0.0
    %714 = vmatprep.subr.mxu0 0.0
    %715 = vmatpush1.xpose.msra.mxu0 0.0
    %716 = vmatprep.subr.mxu0 0.0
    %717 = vmatpush1.xpose.msra.mxu0 0.0
    %718 = vmatprep.subr.mxu0 0.0
    %719 = vmatpush1.xpose.msra.mxu0 0.0
    %720 = vmatprep.subr.mxu0 0.0
    %721 = vmatpush1.xpose.msra.mxu0 0.0
    %722 = vmatprep.subr.mxu0 0.0
    %723 = vmatpush1.xpose.msra.mxu0 0.0
    %724 = vmatprep.subr.mxu0 0.0
    %725 = vmatpush1.xpose.msra.mxu0 0.0
    %726 = vmatprep.subr.mxu0 0.0
    %727 = vmatpush1.xpose.msra.mxu0 0.0
    %728 = vmatprep.subr.mxu0 0.0
    %729 = vmatpush1.xpose.msra.mxu0 0.0
    %730 = vmatprep.subr.mxu0 0.0
    %731 = vmatpush1.xpose.msra.mxu0 0.0
    %732 = vmatprep.subr.mxu0 0.0
    %733 = vmatpush1.xpose.msra.mxu0 0.0
    %734 = vmatprep.subr.mxu0 0.0
    %735 = vmatpush1.xpose.msra.mxu0 0.0
    %736 = vmatprep.subr.mxu0 0.0
    %737 = vmatpush1.xpose.msra.mxu0 0.0
    %738 = vmatprep.subr.mxu0 0.0
    %739 = vmatpush1.xpose.msra.mxu0 0.0
    %740 = vmatprep.subr.mxu0 0.0
    %741 = vmatpush1.xpose.msra.mxu0 0.0
    %742 = vmatprep.subr.mxu0 0.0
    %743 = vmatpush1.xpose.msra.mxu0 0.0
    %744 = vmatprep.subr.mxu0 0.0
    %745 = vmatpush1.xpose.msra.mxu0 0.0
    %746 = vmatprep.subr.mxu0 0.0
    %747 = vmatpush1.xpose.msra.mxu0 0.0
    %748 = vmatprep.subr.mxu0 0.0
    %749 = vmatpush1.xpose.msra.mxu0 0.0
    %750 = vmatprep.subr.mxu0 0.0
    %751 = vmatpush1.xpose.msra.mxu0 0.0
    %752 = vmatprep.subr.mxu0 0.0
    %753 = vmatpush1.xpose.msra.mxu0 0.0
    %754 = vmatprep.mubr.f32.mxu0 0.0
    %755 = vmatmul.mubr.f32.gmra.mrb[0].mxu0 %v686
    %v756 = vpop.f32.mrb[0].mxu0
    %v757 = vadd.f32 %v150, %v756
    %v758 = vpop.f32.mrb[0].mxu0
    %759 = vdwg.mxu0
    %v760 = vsel %vm153, %v225, -inf
    %761 = vmax.xlane.f32.xlu0 %v760
    %v762 = vpop.xlane.xlu0 %761
    %v763 = vsel %vm153, %v301, -inf
    %764 = vmax.xlane.f32.xlu0 %v763
    %v765 = vpop.xlane.xlu0 %764
    %v766 = vsel %vm153, %v377, -inf
    %767 = vmax.xlane.f32.xlu0 %v766
    %v768 = vpop.xlane.xlu0 %767
    %v769 = vsel %vm153, %v453, -inf
    %770 = vmax.xlane.f32.xlu0 %v769
    %v771 = vpop.xlane.xlu0 %770
    %v772 = vsel %vm153, %v529, -inf
    %773 = vmax.xlane.f32.xlu0 %v772
    %v774 = vpop.xlane.xlu0 %773
    %v775 = vsel %vm153, %v605, -inf
    %776 = vmax.xlane.f32.xlu0 %v775
    %v777 = vpop.xlane.xlu0 %776
    %v778 = vsel %vm153, %v681, -inf
    %779 = vmax.xlane.f32.xlu0 %v778
    %v780 = vpop.xlane.xlu0 %779
    %v781 = vsel %vm153, %v757, -inf
    %782 = vmax.xlane.f32.xlu0 %v781
    %v783 = vpop.xlane.xlu0 %782
    %v784 = vsub.f32 %v225, %v762
    %v785 = vsub.f32 %v301, %v765
    %v786 = vsub.f32 %v377, %v768
    %v787 = vsub.f32 %v453, %v771
    %v788 = vsub.f32 %v529, %v774
    %v789 = vsub.f32 %v605, %v777
    %v790 = vsub.f32 %v681, %v780
    %v791 = vsub.f32 %v757, %v783
    %v792 = vmul.f32 %v784, 1.442695
    %v793 = vpow.pop %v792
    %v794 = vmul.f32 %v785, 1.442695
    %v795 = vpow.pop %v794
    %v796 = vmul.f32 %v786, 1.442695
    %v797 = vpow.pop %v796
    %v798 = vmul.f32 %v787, 1.442695
    %v799 = vpow.pop %v798
    %v800 = vmul.f32 %v788, 1.442695
    %v801 = vpow.pop %v800
    %v802 = vmul.f32 %v789, 1.442695
    %v803 = vpow.pop %v802
    %v804 = vmul.f32 %v790, 1.442695
    %v805 = vpow.pop %v804
    %v806 = vmul.f32 %v791, 1.442695
    %v807 = vpow.pop %v806
    %v808 = vsel %vm153, %v793, 0.0
    %809 = vadd.xlane.f32.xlu0 %v808
    %v810 = vpop.xlane.xlu0 %809
    %v811 = vsel %vm153, %v795, 0.0
    %812 = vadd.xlane.f32.xlu0 %v811
    %v813 = vpop.xlane.xlu0 %812
    %v814 = vsel %vm153, %v797, 0.0
    %815 = vadd.xlane.f32.xlu0 %v814
    %v816 = vpop.xlane.xlu0 %815
    %v817 = vsel %vm153, %v799, 0.0
    %818 = vadd.xlane.f32.xlu0 %v817
    %v819 = vpop.xlane.xlu0 %818
    %v820 = vsel %vm153, %v801, 0.0
    %821 = vadd.xlane.f32.xlu0 %v820
    %v822 = vpop.xlane.xlu0 %821
    %v823 = vsel %vm153, %v803, 0.0
    %824 = vadd.xlane.f32.xlu0 %v823
    %v825 = vpop.xlane.xlu0 %824
    %v826 = vsel %vm153, %v805, 0.0
    %827 = vadd.xlane.f32.xlu0 %v826
    %v828 = vpop.xlane.xlu0 %827
    %v829 = vsel %vm153, %v807, 0.0
    %830 = vadd.xlane.f32.xlu0 %v829
    %v831 = vpop.xlane.xlu0 %830
    %v832 = vrcp.pop %v810
    %v833 = vrcp.pop %v813
    %v834 = vrcp.pop %v816
    %v835 = vrcp.pop %v819
    %v836 = vrcp.pop %v822
    %v837 = vrcp.pop %v825
    %v838 = vrcp.pop %v828
    %v839 = vrcp.pop %v831
    %v840 = vmul.f32 %v793, %v832
    %v841 = vmul.f32 %v795, %v833
    %v842 = vmul.f32 %v797, %v834
    %v843 = vmul.f32 %v799, %v835
    %v844 = vmul.f32 %v801, %v836
    %v845 = vmul.f32 %v803, %v837
    %v846 = vmul.f32 %v805, %v838
    %v847 = vmul.f32 %v807, %v839
    %848 = vrot.lane.b32.xlu0 %v130, 64
    %v849 = vpop.permute.xlu0 %848
    %v852 = vsel %vm153, %v840, 0
    %854 = vmatprep.subr.mxu0 0.0
    %855 = vmatpush1.msra.mxu0 %v849
    %856 = vmatprep.subr.mxu0 0.0
    %857 = vmatpush1.msra.mxu0 0.0
    %858 = vmatprep.subr.mxu0 0.0
    %859 = vmatpush1.msra.mxu0 0.0
    %860 = vmatprep.subr.mxu0 0.0
    %861 = vmatpush1.msra.mxu0 0.0
    %862 = vmatprep.subr.mxu0 0.0
    %863 = vmatpush1.msra.mxu0 0.0
    %864 = vmatprep.subr.mxu0 0.0
    %865 = vmatpush1.msra.mxu0 0.0
    %866 = vmatprep.subr.mxu0 0.0
    %867 = vmatpush1.msra.mxu0 0.0
    %868 = vmatprep.subr.mxu0 0.0
    %869 = vmatpush1.msra.mxu0 0.0
    %870 = vmatprep.subr.mxu0 0.0
    %871 = vmatpush1.msra.mxu0 0.0
    %872 = vmatprep.subr.mxu0 0.0
    %873 = vmatpush1.msra.mxu0 0.0
    %874 = vmatprep.subr.mxu0 0.0
    %875 = vmatpush1.msra.mxu0 0.0
    %876 = vmatprep.subr.mxu0 0.0
    %877 = vmatpush1.msra.mxu0 0.0
    %878 = vmatprep.subr.mxu0 0.0
    %879 = vmatpush1.msra.mxu0 0.0
    %880 = vmatprep.subr.mxu0 0.0
    %881 = vmatpush1.msra.mxu0 0.0
    %882 = vmatprep.subr.mxu0 0.0
    %883 = vmatpush1.msra.mxu0 0.0
    %884 = vmatprep.subr.mxu0 0.0
    %885 = vmatpush1.msra.mxu0 0.0
    %886 = vmatprep.subr.mxu0 0.0
    %887 = vmatpush1.msra.mxu0 0.0
    %888 = vmatprep.subr.mxu0 0.0
    %889 = vmatpush1.msra.mxu0 0.0
    %890 = vmatprep.subr.mxu0 0.0
    %891 = vmatpush1.msra.mxu0 0.0
    %892 = vmatprep.subr.mxu0 0.0
    %893 = vmatpush1.msra.mxu0 0.0
    %894 = vmatprep.subr.mxu0 0.0
    %895 = vmatpush1.msra.mxu0 0.0
    %896 = vmatprep.subr.mxu0 0.0
    %897 = vmatpush1.msra.mxu0 0.0
    %898 = vmatprep.subr.mxu0 0.0
    %899 = vmatpush1.msra.mxu0 0.0
    %900 = vmatprep.subr.mxu0 0.0
    %901 = vmatpush1.msra.mxu0 0.0
    %902 = vmatprep.subr.mxu0 0.0
    %903 = vmatpush1.msra.mxu0 0.0
    %904 = vmatprep.subr.mxu0 0.0
    %905 = vmatpush1.msra.mxu0 0.0
    %906 = vmatprep.subr.mxu0 0.0
    %907 = vmatpush1.msra.mxu0 0.0
    %908 = vmatprep.subr.mxu0 0.0
    %909 = vmatpush1.msra.mxu0 0.0
    %910 = vmatprep.subr.mxu0 0.0
    %911 = vmatpush1.msra.mxu0 0.0
    %912 = vmatprep.subr.mxu0 0.0
    %913 = vmatpush1.msra.mxu0 0.0
    %914 = vmatprep.subr.mxu0 0.0
    %915 = vmatpush1.msra.mxu0 0.0
    %916 = vmatprep.subr.mxu0 0.0
    %917 = vmatpush1.msra.mxu0 0.0
    %918 = vmatprep.mubr.f32.mxu0 0.0
    %919 = vmatmul.mubr.f32.gmra.mrb[0].mxu0 %v852
    %v920 = vpop.f32.mrb[0].mxu0
    %v921 = vadd.f32 0.0, %v920
    %v922 = vpop.f32.mrb[0].mxu0
    %923 = vdwg.mxu0
    %924 = vrot.lane.b32.xlu0 %v133, 64
    %v925 = vpop.permute.xlu0 %924
    %v928 = vsel %vm153, %v841, 0
    %930 = vmatprep.subr.mxu0 0.0
    %931 = vmatpush1.msra.mxu0 %v925
    %932 = vmatprep.subr.mxu0 0.0
    %933 = vmatpush1.msra.mxu0 0.0
    %934 = vmatprep.subr.mxu0 0.0
    %935 = vmatpush1.msra.mxu0 0.0
    %936 = vmatprep.subr.mxu0 0.0
    %937 = vmatpush1.msra.mxu0 0.0
    %938 = vmatprep.subr.mxu0 0.0
    %939 = vmatpush1.msra.mxu0 0.0
    %940 = vmatprep.subr.mxu0 0.0
    %941 = vmatpush1.msra.mxu0 0.0
    %942 = vmatprep.subr.mxu0 0.0
    %943 = vmatpush1.msra.mxu0 0.0
    %944 = vmatprep.subr.mxu0 0.0
    %945 = vmatpush1.msra.mxu0 0.0
    %946 = vmatprep.subr.mxu0 0.0
    %947 = vmatpush1.msra.mxu0 0.0
    %948 = vmatprep.subr.mxu0 0.0
    %949 = vmatpush1.msra.mxu0 0.0
    %950 = vmatprep.subr.mxu0 0.0
    %951 = vmatpush1.msra.mxu0 0.0
    %952 = vmatprep.subr.mxu0 0.0
    %953 = vmatpush1.msra.mxu0 0.0
    %954 = vmatprep.subr.mxu0 0.0
    %955 = vmatpush1.msra.mxu0 0.0
    %956 = vmatprep.subr.mxu0 0.0
    %957 = vmatpush1.msra.mxu0 0.0
    %958 = vmatprep.subr.mxu0 0.0
    %959 = vmatpush1.msra.mxu0 0.0
    %960 = vmatprep.subr.mxu0 0.0
    %961 = vmatpush1.msra.mxu0 0.0
    %962 = vmatprep.subr.mxu0 0.0
    %963 = vmatpush1.msra.mxu0 0.0
    %964 = vmatprep.subr.mxu0 0.0
    %965 = vmatpush1.msra.mxu0 0.0
    %966 = vmatprep.subr.mxu0 0.0
    %967 = vmatpush1.msra.mxu0 0.0
    %968 = vmatprep.subr.mxu0 0.0
    %969 = vmatpush1.msra.mxu0 0.0
    %970 = vmatprep.subr.mxu0 0.0
    %971 = vmatpush1.msra.mxu0 0.0
    %972 = vmatprep.subr.mxu0 0.0
    %973 = vmatpush1.msra.mxu0 0.0
    %974 = vmatprep.subr.mxu0 0.0
    %975 = vmatpush1.msra.mxu0 0.0
    %976 = vmatprep.subr.mxu0 0.0
    %977 = vmatpush1.msra.mxu0 0.0
    %978 = vmatprep.subr.mxu0 0.0
    %979 = vmatpush1.msra.mxu0 0.0
    %980 = vmatprep.subr.mxu0 0.0
    %981 = vmatpush1.msra.mxu0 0.0
    %982 = vmatprep.subr.mxu0 0.0
    %983 = vmatpush1.msra.mxu0 0.0
    %984 = vmatprep.subr.mxu0 0.0
    %985 = vmatpush1.msra.mxu0 0.0
    %986 = vmatprep.subr.mxu0 0.0
    %987 = vmatpush1.msra.mxu0 0.0
    %988 = vmatprep.subr.mxu0 0.0
    %989 = vmatpush1.msra.mxu0 0.0
    %990 = vmatprep.subr.mxu0 0.0
    %991 = vmatpush1.msra.mxu0 0.0
    %992 = vmatprep.subr.mxu0 0.0
    %993 = vmatpush1.msra.mxu0 0.0
    %994 = vmatprep.mubr.f32.mxu0 0.0
    %995 = vmatmul.mubr.f32.gmra.mrb[0].mxu0 %v928
    %v996 = vpop.f32.mrb[0].mxu0
    %v997 = vadd.f32 0.0, %v996
    %v998 = vpop.f32.mrb[0].mxu0
    %999 = vdwg.mxu0
    %1000 = vrot.lane.b32.xlu0 %v139, 64
    %v1001 = vpop.permute.xlu0 %1000
    %v1004 = vsel %vm153, %v842, 0
    %1006 = vmatprep.subr.mxu0 0.0
    %1007 = vmatpush1.msra.mxu0 %v1001
    %1008 = vmatprep.subr.mxu0 0.0
    %1009 = vmatpush1.msra.mxu0 0.0
    %1010 = vmatprep.subr.mxu0 0.0
    %1011 = vmatpush1.msra.mxu0 0.0
    %1012 = vmatprep.subr.mxu0 0.0
    %1013 = vmatpush1.msra.mxu0 0.0
    %1014 = vmatprep.subr.mxu0 0.0
    %1015 = vmatpush1.msra.mxu0 0.0
    %1016 = vmatprep.subr.mxu0 0.0
    %1017 = vmatpush1.msra.mxu0 0.0
    %1018 = vmatprep.subr.mxu0 0.0
    %1019 = vmatpush1.msra.mxu0 0.0
    %1020 = vmatprep.subr.mxu0 0.0
    %1021 = vmatpush1.msra.mxu0 0.0
    %1022 = vmatprep.subr.mxu0 0.0
    %1023 = vmatpush1.msra.mxu0 0.0
    %1024 = vmatprep.subr.mxu0 0.0
    %1025 = vmatpush1.msra.mxu0 0.0
    %1026 = vmatprep.subr.mxu0 0.0
    %1027 = vmatpush1.msra.mxu0 0.0
    %1028 = vmatprep.subr.mxu0 0.0
    %1029 = vmatpush1.msra.mxu0 0.0
    %1030 = vmatprep.subr.mxu0 0.0
    %1031 = vmatpush1.msra.mxu0 0.0
    %1032 = vmatprep.subr.mxu0 0.0
    %1033 = vmatpush1.msra.mxu0 0.0
    %1034 = vmatprep.subr.mxu0 0.0
    %1035 = vmatpush1.msra.mxu0 0.0
    %1036 = vmatprep.subr.mxu0 0.0
    %1037 = vmatpush1.msra.mxu0 0.0
    %1038 = vmatprep.subr.mxu0 0.0
    %1039 = vmatpush1.msra.mxu0 0.0
    %1040 = vmatprep.subr.mxu0 0.0
    %1041 = vmatpush1.msra.mxu0 0.0
    %1042 = vmatprep.subr.mxu0 0.0
    %1043 = vmatpush1.msra.mxu0 0.0
    %1044 = vmatprep.subr.mxu0 0.0
    %1045 = vmatpush1.msra.mxu0 0.0
    %1046 = vmatprep.subr.mxu0 0.0
    %1047 = vmatpush1.msra.mxu0 0.0
    %1048 = vmatprep.subr.mxu0 0.0
    %1049 = vmatpush1.msra.mxu0 0.0
    %1050 = vmatprep.subr.mxu0 0.0
    %1051 = vmatpush1.msra.mxu0 0.0
    %1052 = vmatprep.subr.mxu0 0.0
    %1053 = vmatpush1.msra.mxu0 0.0
    %1054 = vmatprep.subr.mxu0 0.0
    %1055 = vmatpush1.msra.mxu0 0.0
    %1056 = vmatprep.subr.mxu0 0.0
    %1057 = vmatpush1.msra.mxu0 0.0
    %1058 = vmatprep.subr.mxu0 0.0
    %1059 = vmatpush1.msra.mxu0 0.0
    %1060 = vmatprep.subr.mxu0 0.0
    %1061 = vmatpush1.msra.mxu0 0.0
    %1062 = vmatprep.subr.mxu0 0.0
    %1063 = vmatpush1.msra.mxu0 0.0
    %1064 = vmatprep.subr.mxu0 0.0
    %1065 = vmatpush1.msra.mxu0 0.0
    %1066 = vmatprep.subr.mxu0 0.0
    %1067 = vmatpush1.msra.mxu0 0.0
    %1068 = vmatprep.subr.mxu0 0.0
    %1069 = vmatpush1.msra.mxu0 0.0
    %1070 = vmatprep.mubr.f32.mxu0 0.0
    %1071 = vmatmul.mubr.f32.gmra.mrb[0].mxu0 %v1004
    %v1072 = vpop.f32.mrb[0].mxu0
    %v1073 = vadd.f32 0.0, %v1072
    %v1074 = vpop.f32.mrb[0].mxu0
    %1075 = vdwg.mxu0
    %1076 = vrot.lane.b32.xlu0 %v141, 64
    %v1077 = vpop.permute.xlu0 %1076
    %v1080 = vsel %vm153, %v843, 0
    %1082 = vmatprep.subr.mxu0 0.0
    %1083 = vmatpush1.msra.mxu0 %v1077
    %1084 = vmatprep.subr.mxu0 0.0
    %1085 = vmatpush1.msra.mxu0 0.0
    %1086 = vmatprep.subr.mxu0 0.0
    %1087 = vmatpush1.msra.mxu0 0.0
    %1088 = vmatprep.subr.mxu0 0.0
    %1089 = vmatpush1.msra.mxu0 0.0
    %1090 = vmatprep.subr.mxu0 0.0
    %1091 = vmatpush1.msra.mxu0 0.0
    %1092 = vmatprep.subr.mxu0 0.0
    %1093 = vmatpush1.msra.mxu0 0.0
    %1094 = vmatprep.subr.mxu0 0.0
    %1095 = vmatpush1.msra.mxu0 0.0
    %1096 = vmatprep.subr.mxu0 0.0
    %1097 = vmatpush1.msra.mxu0 0.0
    %1098 = vmatprep.subr.mxu0 0.0
    %1099 = vmatpush1.msra.mxu0 0.0
    %1100 = vmatprep.subr.mxu0 0.0
    %1101 = vmatpush1.msra.mxu0 0.0
    %1102 = vmatprep.subr.mxu0 0.0
    %1103 = vmatpush1.msra.mxu0 0.0
    %1104 = vmatprep.subr.mxu0 0.0
    %1105 = vmatpush1.msra.mxu0 0.0
    %1106 = vmatprep.subr.mxu0 0.0
    %1107 = vmatpush1.msra.mxu0 0.0
    %1108 = vmatprep.subr.mxu0 0.0
    %1109 = vmatpush1.msra.mxu0 0.0
    %1110 = vmatprep.subr.mxu0 0.0
    %1111 = vmatpush1.msra.mxu0 0.0
    %1112 = vmatprep.subr.mxu0 0.0
    %1113 = vmatpush1.msra.mxu0 0.0
    %1114 = vmatprep.subr.mxu0 0.0
    %1115 = vmatpush1.msra.mxu0 0.0
    %1116 = vmatprep.subr.mxu0 0.0
    %1117 = vmatpush1.msra.mxu0 0.0
    %1118 = vmatprep.subr.mxu0 0.0
    %1119 = vmatpush1.msra.mxu0 0.0
    %1120 = vmatprep.subr.mxu0 0.0
    %1121 = vmatpush1.msra.mxu0 0.0
    %1122 = vmatprep.subr.mxu0 0.0
    %1123 = vmatpush1.msra.mxu0 0.0
    %1124 = vmatprep.subr.mxu0 0.0
    %1125 = vmatpush1.msra.mxu0 0.0
    %1126 = vmatprep.subr.mxu0 0.0
    %1127 = vmatpush1.msra.mxu0 0.0
    %1128 = vmatprep.subr.mxu0 0.0
    %1129 = vmatpush1.msra.mxu0 0.0
    %1130 = vmatprep.subr.mxu0 0.0
    %1131 = vmatpush1.msra.mxu0 0.0
    %1132 = vmatprep.subr.mxu0 0.0
    %1133 = vmatpush1.msra.mxu0 0.0
    %1134 = vmatprep.subr.mxu0 0.0
    %1135 = vmatpush1.msra.mxu0 0.0
    %1136 = vmatprep.subr.mxu0 0.0
    %1137 = vmatpush1.msra.mxu0 0.0
    %1138 = vmatprep.subr.mxu0 0.0
    %1139 = vmatpush1.msra.mxu0 0.0
    %1140 = vmatprep.subr.mxu0 0.0
    %1141 = vmatpush1.msra.mxu0 0.0
    %1142 = vmatprep.subr.mxu0 0.0
    %1143 = vmatpush1.msra.mxu0 0.0
    %1144 = vmatprep.subr.mxu0 0.0
    %1145 = vmatpush1.msra.mxu0 0.0
    %1146 = vmatprep.mubr.f32.mxu0 0.0
    %1147 = vmatmul.mubr.f32.gmra.mrb[0].mxu0 %v1080
    %v1148 = vpop.f32.mrb[0].mxu0
    %v1149 = vadd.f32 0.0, %v1148
    %v1150 = vpop.f32.mrb[0].mxu0
    %1151 = vdwg.mxu0
    %1152 = vrot.lane.b32.xlu0 %v143, 64
    %v1153 = vpop.permute.xlu0 %1152
    %v1156 = vsel %vm153, %v844, 0
    %1158 = vmatprep.subr.mxu0 0.0
    %1159 = vmatpush1.msra.mxu0 %v1153
    %1160 = vmatprep.subr.mxu0 0.0
    %1161 = vmatpush1.msra.mxu0 0.0
    %1162 = vmatprep.subr.mxu0 0.0
    %1163 = vmatpush1.msra.mxu0 0.0
    %1164 = vmatprep.subr.mxu0 0.0
    %1165 = vmatpush1.msra.mxu0 0.0
    %1166 = vmatprep.subr.mxu0 0.0
    %1167 = vmatpush1.msra.mxu0 0.0
    %1168 = vmatprep.subr.mxu0 0.0
    %1169 = vmatpush1.msra.mxu0 0.0
    %1170 = vmatprep.subr.mxu0 0.0
    %1171 = vmatpush1.msra.mxu0 0.0
    %1172 = vmatprep.subr.mxu0 0.0
    %1173 = vmatpush1.msra.mxu0 0.0
    %1174 = vmatprep.subr.mxu0 0.0
    %1175 = vmatpush1.msra.mxu0 0.0
    %1176 = vmatprep.subr.mxu0 0.0
    %1177 = vmatpush1.msra.mxu0 0.0
    %1178 = vmatprep.subr.mxu0 0.0
    %1179 = vmatpush1.msra.mxu0 0.0
    %1180 = vmatprep.subr.mxu0 0.0
    %1181 = vmatpush1.msra.mxu0 0.0
    %1182 = vmatprep.subr.mxu0 0.0
    %1183 = vmatpush1.msra.mxu0 0.0
    %1184 = vmatprep.subr.mxu0 0.0
    %1185 = vmatpush1.msra.mxu0 0.0
    %1186 = vmatprep.subr.mxu0 0.0
    %1187 = vmatpush1.msra.mxu0 0.0
    %1188 = vmatprep.subr.mxu0 0.0
    %1189 = vmatpush1.msra.mxu0 0.0
    %1190 = vmatprep.subr.mxu0 0.0
    %1191 = vmatpush1.msra.mxu0 0.0
    %1192 = vmatprep.subr.mxu0 0.0
    %1193 = vmatpush1.msra.mxu0 0.0
    %1194 = vmatprep.subr.mxu0 0.0
    %1195 = vmatpush1.msra.mxu0 0.0
    %1196 = vmatprep.subr.mxu0 0.0
    %1197 = vmatpush1.msra.mxu0 0.0
    %1198 = vmatprep.subr.mxu0 0.0
    %1199 = vmatpush1.msra.mxu0 0.0
    %1200 = vmatprep.subr.mxu0 0.0
    %1201 = vmatpush1.msra.mxu0 0.0
    %1202 = vmatprep.subr.mxu0 0.0
    %1203 = vmatpush1.msra.mxu0 0.0
    %1204 = vmatprep.subr.mxu0 0.0
    %1205 = vmatpush1.msra.mxu0 0.0
    %1206 = vmatprep.subr.mxu0 0.0
    %1207 = vmatpush1.msra.mxu0 0.0
    %1208 = vmatprep.subr.mxu0 0.0
    %1209 = vmatpush1.msra.mxu0 0.0
    %1210 = vmatprep.subr.mxu0 0.0
    %1211 = vmatpush1.msra.mxu0 0.0
    %1212 = vmatprep.subr.mxu0 0.0
    %1213 = vmatpush1.msra.mxu0 0.0
    %1214 = vmatprep.subr.mxu0 0.0
    %1215 = vmatpush1.msra.mxu0 0.0
    %1216 = vmatprep.subr.mxu0 0.0
    %1217 = vmatpush1.msra.mxu0 0.0
    %1218 = vmatprep.subr.mxu0 0.0
    %1219 = vmatpush1.msra.mxu0 0.0
    %1220 = vmatprep.subr.mxu0 0.0
    %1221 = vmatpush1.msra.mxu0 0.0
    %1222 = vmatprep.mubr.f32.mxu0 0.0
    %1223 = vmatmul.mubr.f32.gmra.mrb[0].mxu0 %v1156
    %v1224 = vpop.f32.mrb[0].mxu0
    %v1225 = vadd.f32 0.0, %v1224
    %v1226 = vpop.f32.mrb[0].mxu0
    %1227 = vdwg.mxu0
    %1228 = vrot.lane.b32.xlu0 %v145, 64
    %v1229 = vpop.permute.xlu0 %1228
    %v1232 = vsel %vm153, %v845, 0
    %1234 = vmatprep.subr.mxu0 0.0
    %1235 = vmatpush1.msra.mxu0 %v1229
    %1236 = vmatprep.subr.mxu0 0.0
    %1237 = vmatpush1.msra.mxu0 0.0
    %1238 = vmatprep.subr.mxu0 0.0
    %1239 = vmatpush1.msra.mxu0 0.0
    %1240 = vmatprep.subr.mxu0 0.0
    %1241 = vmatpush1.msra.mxu0 0.0
    %1242 = vmatprep.subr.mxu0 0.0
    %1243 = vmatpush1.msra.mxu0 0.0
    %1244 = vmatprep.subr.mxu0 0.0
    %1245 = vmatpush1.msra.mxu0 0.0
    %1246 = vmatprep.subr.mxu0 0.0
    %1247 = vmatpush1.msra.mxu0 0.0
    %1248 = vmatprep.subr.mxu0 0.0
    %1249 = vmatpush1.msra.mxu0 0.0
    %1250 = vmatprep.subr.mxu0 0.0
    %1251 = vmatpush1.msra.mxu0 0.0
    %1252 = vmatprep.subr.mxu0 0.0
    %1253 = vmatpush1.msra.mxu0 0.0
    %1254 = vmatprep.subr.mxu0 0.0
    %1255 = vmatpush1.msra.mxu0 0.0
    %1256 = vmatprep.subr.mxu0 0.0
    %1257 = vmatpush1.msra.mxu0 0.0
    %1258 = vmatprep.subr.mxu0 0.0
    %1259 = vmatpush1.msra.mxu0 0.0
    %1260 = vmatprep.subr.mxu0 0.0
    %1261 = vmatpush1.msra.mxu0 0.0
    %1262 = vmatprep.subr.mxu0 0.0
    %1263 = vmatpush1.msra.mxu0 0.0
    %1264 = vmatprep.subr.mxu0 0.0
    %1265 = vmatpush1.msra.mxu0 0.0
    %1266 = vmatprep.subr.mxu0 0.0
    %1267 = vmatpush1.msra.mxu0 0.0
    %1268 = vmatprep.subr.mxu0 0.0
    %1269 = vmatpush1.msra.mxu0 0.0
    %1270 = vmatprep.subr.mxu0 0.0
    %1271 = vmatpush1.msra.mxu0 0.0
    %1272 = vmatprep.subr.mxu0 0.0
    %1273 = vmatpush1.msra.mxu0 0.0
    %1274 = vmatprep.subr.mxu0 0.0
    %1275 = vmatpush1.msra.mxu0 0.0
    %1276 = vmatprep.subr.mxu0 0.0
    %1277 = vmatpush1.msra.mxu0 0.0
    %1278 = vmatprep.subr.mxu0 0.0
    %1279 = vmatpush1.msra.mxu0 0.0
    %1280 = vmatprep.subr.mxu0 0.0
    %1281 = vmatpush1.msra.mxu0 0.0
    %1282 = vmatprep.subr.mxu0 0.0
    %1283 = vmatpush1.msra.mxu0 0.0
    %1284 = vmatprep.subr.mxu0 0.0
    %1285 = vmatpush1.msra.mxu0 0.0
    %1286 = vmatprep.subr.mxu0 0.0
    %1287 = vmatpush1.msra.mxu0 0.0
    %1288 = vmatprep.subr.mxu0 0.0
    %1289 = vmatpush1.msra.mxu0 0.0
    %1290 = vmatprep.subr.mxu0 0.0
    %1291 = vmatpush1.msra.mxu0 0.0
    %1292 = vmatprep.subr.mxu0 0.0
    %1293 = vmatpush1.msra.mxu0 0.0
    %1294 = vmatprep.subr.mxu0 0.0
    %1295 = vmatpush1.msra.mxu0 0.0
    %1296 = vmatprep.subr.mxu0 0.0
    %1297 = vmatpush1.msra.mxu0 0.0
    %1298 = vmatprep.mubr.f32.mxu0 0.0
    %1299 = vmatmul.mubr.f32.gmra.mrb[0].mxu0 %v1232
    %v1300 = vpop.f32.mrb[0].mxu0
    %v1301 = vadd.f32 0.0, %v1300
    %v1302 = vpop.f32.mrb[0].mxu0
    %1303 = vdwg.mxu0
    %1304 = vrot.lane.b32.xlu0 %v147, 64
    %v1305 = vpop.permute.xlu0 %1304
    %v1308 = vsel %vm153, %v846, 0
    %1310 = vmatprep.subr.mxu0 0.0
    %1311 = vmatpush1.msra.mxu0 %v1305
    %1312 = vmatprep.subr.mxu0 0.0
    %1313 = vmatpush1.msra.mxu0 0.0
    %1314 = vmatprep.subr.mxu0 0.0
    %1315 = vmatpush1.msra.mxu0 0.0
    %1316 = vmatprep.subr.mxu0 0.0
    %1317 = vmatpush1.msra.mxu0 0.0
    %1318 = vmatprep.subr.mxu0 0.0
    %1319 = vmatpush1.msra.mxu0 0.0
    %1320 = vmatprep.subr.mxu0 0.0
    %1321 = vmatpush1.msra.mxu0 0.0
    %1322 = vmatprep.subr.mxu0 0.0
    %1323 = vmatpush1.msra.mxu0 0.0
    %1324 = vmatprep.subr.mxu0 0.0
    %1325 = vmatpush1.msra.mxu0 0.0
    %1326 = vmatprep.subr.mxu0 0.0
    %1327 = vmatpush1.msra.mxu0 0.0
    %1328 = vmatprep.subr.mxu0 0.0
    %1329 = vmatpush1.msra.mxu0 0.0
    %1330 = vmatprep.subr.mxu0 0.0
    %1331 = vmatpush1.msra.mxu0 0.0
    %1332 = vmatprep.subr.mxu0 0.0
    %1333 = vmatpush1.msra.mxu0 0.0
    %1334 = vmatprep.subr.mxu0 0.0
    %1335 = vmatpush1.msra.mxu0 0.0
    %1336 = vmatprep.subr.mxu0 0.0
    %1337 = vmatpush1.msra.mxu0 0.0
    %1338 = vmatprep.subr.mxu0 0.0
    %1339 = vmatpush1.msra.mxu0 0.0
    %1340 = vmatprep.subr.mxu0 0.0
    %1341 = vmatpush1.msra.mxu0 0.0
    %1342 = vmatprep.subr.mxu0 0.0
    %1343 = vmatpush1.msra.mxu0 0.0
    %1344 = vmatprep.subr.mxu0 0.0
    %1345 = vmatpush1.msra.mxu0 0.0
    %1346 = vmatprep.subr.mxu0 0.0
    %1347 = vmatpush1.msra.mxu0 0.0
    %1348 = vmatprep.subr.mxu0 0.0
    %1349 = vmatpush1.msra.mxu0 0.0
    %1350 = vmatprep.subr.mxu0 0.0
    %1351 = vmatpush1.msra.mxu0 0.0
    %1352 = vmatprep.subr.mxu0 0.0
    %1353 = vmatpush1.msra.mxu0 0.0
    %1354 = vmatprep.subr.mxu0 0.0
    %1355 = vmatpush1.msra.mxu0 0.0
    %1356 = vmatprep.subr.mxu0 0.0
    %1357 = vmatpush1.msra.mxu0 0.0
    %1358 = vmatprep.subr.mxu0 0.0
    %1359 = vmatpush1.msra.mxu0 0.0
    %1360 = vmatprep.subr.mxu0 0.0
    %1361 = vmatpush1.msra.mxu0 0.0
    %1362 = vmatprep.subr.mxu0 0.0
    %1363 = vmatpush1.msra.mxu0 0.0
    %1364 = vmatprep.subr.mxu0 0.0
    %1365 = vmatpush1.msra.mxu0 0.0
    %1366 = vmatprep.subr.mxu0 0.0
    %1367 = vmatpush1.msra.mxu0 0.0
    %1368 = vmatprep.subr.mxu0 0.0
    %1369 = vmatpush1.msra.mxu0 0.0
    %1370 = vmatprep.subr.mxu0 0.0
    %1371 = vmatpush1.msra.mxu0 0.0
    %1372 = vmatprep.subr.mxu0 0.0
    %1373 = vmatpush1.msra.mxu0 0.0
    %1374 = vmatprep.mubr.f32.mxu0 0.0
    %1375 = vmatmul.mubr.f32.gmra.mrb[0].mxu0 %v1308
    %v1376 = vpop.f32.mrb[0].mxu0
    %v1377 = vadd.f32 0.0, %v1376
    %v1378 = vpop.f32.mrb[0].mxu0
    %1379 = vdwg.mxu0
    %1380 = vrot.lane.b32.xlu0 %v149, 64
    %v1381 = vpop.permute.xlu0 %1380
    %v1384 = vsel %vm153, %v847, 0
    %1386 = vmatprep.subr.mxu0 0.0
    %1387 = vmatpush1.msra.mxu0 %v1381
    %1388 = vmatprep.subr.mxu0 0.0
    %1389 = vmatpush1.msra.mxu0 0.0
    %1390 = vmatprep.subr.mxu0 0.0
    %1391 = vmatpush1.msra.mxu0 0.0
    %1392 = vmatprep.subr.mxu0 0.0
    %1393 = vmatpush1.msra.mxu0 0.0
    %1394 = vmatprep.subr.mxu0 0.0
    %1395 = vmatpush1.msra.mxu0 0.0
    %1396 = vmatprep.subr.mxu0 0.0
    %1397 = vmatpush1.msra.mxu0 0.0
    %1398 = vmatprep.subr.mxu0 0.0
    %1399 = vmatpush1.msra.mxu0 0.0
    %1400 = vmatprep.subr.mxu0 0.0
    %1401 = vmatpush1.msra.mxu0 0.0
    %1402 = vmatprep.subr.mxu0 0.0
    %1403 = vmatpush1.msra.mxu0 0.0
    %1404 = vmatprep.subr.mxu0 0.0
    %1405 = vmatpush1.msra.mxu0 0.0
    %1406 = vmatprep.subr.mxu0 0.0
    %1407 = vmatpush1.msra.mxu0 0.0
    %1408 = vmatprep.subr.mxu0 0.0
    %1409 = vmatpush1.msra.mxu0 0.0
    %1410 = vmatprep.subr.mxu0 0.0
    %1411 = vmatpush1.msra.mxu0 0.0
    %1412 = vmatprep.subr.mxu0 0.0
    %1413 = vmatpush1.msra.mxu0 0.0
    %1414 = vmatprep.subr.mxu0 0.0
    %1415 = vmatpush1.msra.mxu0 0.0
    %1416 = vmatprep.subr.mxu0 0.0
    %1417 = vmatpush1.msra.mxu0 0.0
    %1418 = vmatprep.subr.mxu0 0.0
    %1419 = vmatpush1.msra.mxu0 0.0
    %1420 = vmatprep.subr.mxu0 0.0
    %1421 = vmatpush1.msra.mxu0 0.0
    %1422 = vmatprep.subr.mxu0 0.0
    %1423 = vmatpush1.msra.mxu0 0.0
    %1424 = vmatprep.subr.mxu0 0.0
    %1425 = vmatpush1.msra.mxu0 0.0
    %1426 = vmatprep.subr.mxu0 0.0
    %1427 = vmatpush1.msra.mxu0 0.0
    %1428 = vmatprep.subr.mxu0 0.0
    %1429 = vmatpush1.msra.mxu0 0.0
    %1430 = vmatprep.subr.mxu0 0.0
    %1431 = vmatpush1.msra.mxu0 0.0
    %1432 = vmatprep.subr.mxu0 0.0
    %1433 = vmatpush1.msra.mxu0 0.0
    %1434 = vmatprep.subr.mxu0 0.0
    %1435 = vmatpush1.msra.mxu0 0.0
    %1436 = vmatprep.subr.mxu0 0.0
    %1437 = vmatpush1.msra.mxu0 0.0
    %1438 = vmatprep.subr.mxu0 0.0
    %1439 = vmatpush1.msra.mxu0 0.0
    %1440 = vmatprep.subr.mxu0 0.0
    %1441 = vmatpush1.msra.mxu0 0.0
    %1442 = vmatprep.subr.mxu0 0.0
    %1443 = vmatpush1.msra.mxu0 0.0
    %1444 = vmatprep.subr.mxu0 0.0
    %1445 = vmatpush1.msra.mxu0 0.0
    %1446 = vmatprep.subr.mxu0 0.0
    %1447 = vmatpush1.msra.mxu0 0.0
    %1448 = vmatprep.subr.mxu0 0.0
    %1449 = vmatpush1.msra.mxu0 0.0
    %1450 = vmatprep.mubr.f32.mxu0 0.0
    %1451 = vmatmul.mubr.f32.gmra.mrb[0].mxu0 %v1384
    %v1452 = vpop.f32.mrb[0].mxu0
    %v1453 = vadd.f32 0.0, %v1452
    %v1454 = vpop.f32.mrb[0].mxu0
    %1455 = vdwg.mxu0
    %1458 = vrot.lane.b32.xlu0 %v1073, 8
    %v1459 = vpop.permute.xlu0 %1458
    %1460 = vrot.lane.b32.xlu0 %v1149, 8
    %v1461 = vpop.permute.xlu0 %1460
    %1466 = vrot.lane.b32.xlu0 %v1225, 16
    %v1467 = vpop.permute.xlu0 %1466
    %1468 = vrot.lane.b32.xlu0 %v1301, 16
    %v1469 = vpop.permute.xlu0 %1468
    %1474 = vrot.lane.b32.xlu0 %v1377, 24
    %v1475 = vpop.permute.xlu0 %1474
    %1476 = vrot.lane.b32.xlu0 %v1453, 24
    %v1477 = vpop.permute.xlu0 %1476
    %v1480 = vsel %vm153, %v921, %v1459
    %v1481 = vsel %vm153, %v997, %v1461
    %vm1482 = vcmask 130048
    %v1483 = vsel %vm1482, %v1480, %v1467
    %v1484 = vsel %vm1482, %v1481, %v1469
    %vm1485 = vcmask 195584
    %v1486 = vsel %vm1485, %v1483, %v1475
    %v1487 = vsel %vm1485, %v1484, %v1477
    %v1488 = vpack.c.bf16 %v1487, %v1486
    %v1489 = vld [vmem:[%s4] sm:$0xf]
    %v1490 = vld [vmem:[%s4 + $0x4] sm:$0xf]
    %v1491 = vld [vmem:[%s4 + $0x8] sm:$0xf]
    %v1492 = vld [vmem:[%s4 + $0xc] sm:$0xf]
    %v1493 = vlaneseq
    %v1494 = vshrl.u32 %v1493, 7
    %v1495 = vsub.s32 4, %v1494
    %v1496 = vrot.slane %v30, %v1495
    %v1501 = vunpack.c.l.b16 %v1489
    %v1502 = vunpack.c.l.b16 %v1490
    %v1503 = vunpack.c.l.b16 %v1491
    %v1504 = vunpack.c.l.b16 %v1492
    %v1505 = vpack.c.b16 %v1502, %v1501
    %v1506 = vpack.c.b16 %v1504, %v1503
    %v1510 = vsel %vm31, %v1488, 0
    %1512 = vmatprep.subr.bf16.mxu0 0
    %1513 = vmatpush1.bf16.msra.mxu0 %v1505
    %1514 = vmatprep.subr.bf16.mxu0 0
    %1515 = vmatpush1.bf16.msra.mxu0 %v1506
    %1516 = vmatprep.subr.bf16.mxu0 0
    %1517 = vmatpush1.bf16.msra.mxu0 0
    %1518 = vmatprep.subr.bf16.mxu0 0
    %1519 = vmatpush1.bf16.msra.mxu0 0
    %1520 = vmatprep.subr.bf16.mxu0 0
    %1521 = vmatpush1.bf16.msra.mxu0 0
    %1522 = vmatprep.subr.bf16.mxu0 0
    %1523 = vmatpush1.bf16.msra.mxu0 0
    %1524 = vmatprep.subr.bf16.mxu0 0
    %1525 = vmatpush1.bf16.msra.mxu0 0
    %1526 = vmatprep.subr.bf16.mxu0 0
    %1527 = vmatpush1.bf16.msra.mxu0 0
    %1528 = vmatprep.subr.bf16.mxu0 0
    %1529 = vmatpush1.bf16.msra.mxu0 0
    %1530 = vmatprep.subr.bf16.mxu0 0
    %1531 = vmatpush1.bf16.msra.mxu0 0
    %1532 = vmatprep.subr.bf16.mxu0 0
    %1533 = vmatpush1.bf16.msra.mxu0 0
    %1534 = vmatprep.subr.bf16.mxu0 0
    %1535 = vmatpush1.bf16.msra.mxu0 0
    %1536 = vmatprep.subr.bf16.mxu0 0
    %1537 = vmatpush1.bf16.msra.mxu0 0
    %1538 = vmatprep.subr.bf16.mxu0 0
    %1539 = vmatpush1.bf16.msra.mxu0 0
    %1540 = vmatprep.subr.bf16.mxu0 0
    %1541 = vmatpush1.bf16.msra.mxu0 0
    %1542 = vmatprep.subr.bf16.mxu0 0
    %1543 = vmatpush1.bf16.msra.mxu0 0
    %1544 = vmatprep.mubr.bf16.mxu0 0
    %1545 = vmatmul.mubr.bf16.gmra.mrb[0].mxu0 %v1510
    %v1546 = vpop.f32.mrb[0].mxu0
    %v1547 = vadd.f32 %v1496, %v1546
    %v1548 = vpop.f32.mrb[0].mxu0
    %v1549 = vpop.f32.mrb[0].mxu0
    %v1550 = vadd.f32 %v1496, %v1549
    %v1551 = vpop.f32.mrb[0].mxu0
    %1552 = vdwg.mxu0
    %v1553 = vadd.f32 %v28, %v1547
    %v1554 = vadd.f32 %v29, %v1550
    %v1555 = vsel %vm31, %v1553, 0.0
    %1556 = vadd.xlane.f32.xlu0 %v1555
    %v1557 = vpop.xlane.xlu0 %1556
    %v1558 = vsel %vm31, %v1554, 0.0
    %1559 = vadd.xlane.f32.xlu0 %v1558
    %v1560 = vpop.xlane.xlu0 %1559
    %v1561 = vmul.f32 %v1557, %v38
    %v1562 = vmul.f32 %v1560, %v38
    %v1563 = vsub.f32 %v1553, %v1561
    %v1564 = vsub.f32 %v1554, %v1562
    %v1565 = vmul.f32 %v1563, %v1563
    %v1566 = vmul.f32 %v1564, %v1564
    %v1567 = vsel %vm31, %v1565, 0.0
    %1568 = vadd.xlane.f32.xlu0 %v1567
    %v1569 = vpop.xlane.xlu0 %1568
    %v1570 = vsel %vm31, %v1566, 0.0
    %1571 = vadd.xlane.f32.xlu0 %v1570
    %v1572 = vpop.xlane.xlu0 %1571
    %v1573 = vmul.f32 %v1569, %v38
    %v1574 = vmul.f32 %v1572, %v38
    %v1575 = vadd.f32 %v1573, 1e-05
    %v1576 = vadd.f32 %v1574, 1e-05
    %v1577 = vrsqrt.pop %v1575
    %v1578 = vrsqrt.pop %v1576
    %v1579 = vmul.f32 %v1563, %v1577
    %v1580 = vmul.f32 %v1564, %v1578
    %v1581 = vlaneseq
    %v1582 = vshrl.u32 %v1581, 7
    %v1583 = vsub.s32 2, %v1582
    %v1584 = vrot.slane %v30, %v1583
    %v1585 = vmul.f32 %v1579, %v1584
    %v1586 = vmul.f32 %v1580, %v1584
    %v1587 = vlaneseq
    %v1588 = vshrl.u32 %v1587, 7
    %v1589 = vsub.s32 3, %v1588
    %v1590 = vrot.slane %v30, %v1589
    %v1591 = vadd.f32 %v1585, %v1590
    %v1592 = vadd.f32 %v1586, %v1590
    %v1593 = vpack.c.bf16 %v1592, %v1591
    %v1594 = vld [vmem:[%s5] sm:$0xf]
    %v1595 = vld [vmem:[%s5 + $0x4] sm:$0xf]
    %v1596 = vld [vmem:[%s5 + $0x8] sm:$0xf]
    %v1597 = vld [vmem:[%s5 + $0xc] sm:$0xf]
    %v1598 = vlaneseq
    %v1599 = vshrl.u32 %v1598, 7
    %v1600 = vsub.s32 7, %v1599
    %v1601 = vrot.slane %v30, %v1600
    %v1606 = vunpack.c.l.b16 %v1594
    %v1607 = vunpack.c.l.b16 %v1595
    %v1608 = vunpack.c.l.b16 %v1596
    %v1609 = vunpack.c.l.b16 %v1597
    %v1610 = vpack.c.b16 %v1607, %v1606
    %v1611 = vpack.c.b16 %v1609, %v1608
    %v1615 = vsel %vm31, %v1593, 0
    %1617 = vmatprep.subr.bf16.mxu0 0
    %1618 = vmatpush1.bf16.msra.mxu0 %v1610
    %1619 = vmatprep.subr.bf16.mxu0 0
    %1620 = vmatpush1.bf16.msra.mxu0 %v1611
    %1621 = vmatprep.subr.bf16.mxu0 0
    %1622 = vmatpush1.bf16.msra.mxu0 0
    %1623 = vmatprep.subr.bf16.mxu0 0
    %1624 = vmatpush1.bf16.msra.mxu0 0
    %1625 = vmatprep.subr.bf16.mxu0 0
    %1626 = vmatpush1.bf16.msra.mxu0 0
    %1627 = vmatprep.subr.bf16.mxu0 0
    %1628 = vmatpush1.bf16.msra.mxu0 0
    %1629 = vmatprep.subr.bf16.mxu0 0
    %1630 = vmatpush1.bf16.msra.mxu0 0
    %1631 = vmatprep.subr.bf16.mxu0 0
    %1632 = vmatpush1.bf16.msra.mxu0 0
    %1633 = vmatprep.subr.bf16.mxu0 0
    %1634 = vmatpush1.bf16.msra.mxu0 0
    %1635 = vmatprep.subr.bf16.mxu0 0
    %1636 = vmatpush1.bf16.msra.mxu0 0
    %1637 = vmatprep.subr.bf16.mxu0 0
    %1638 = vmatpush1.bf16.msra.mxu0 0
    %1639 = vmatprep.subr.bf16.mxu0 0
    %1640 = vmatpush1.bf16.msra.mxu0 0
    %1641 = vmatprep.subr.bf16.mxu0 0
    %1642 = vmatpush1.bf16.msra.mxu0 0
    %1643 = vmatprep.subr.bf16.mxu0 0
    %1644 = vmatpush1.bf16.msra.mxu0 0
    %1645 = vmatprep.subr.bf16.mxu0 0
    %1646 = vmatpush1.bf16.msra.mxu0 0
    %1647 = vmatprep.subr.bf16.mxu0 0
    %1648 = vmatpush1.bf16.msra.mxu0 0
    %1649 = vmatprep.mubr.bf16.mxu0 0
    %1650 = vmatmul.mubr.bf16.gmra.mrb[0].mxu0 %v1615
    %v1651 = vpop.f32.mrb[0].mxu0
    %v1652 = vadd.f32 %v1601, %v1651
    %v1653 = vpop.f32.mrb[0].mxu0
    %v1654 = vpop.f32.mrb[0].mxu0
    %v1655 = vadd.f32 %v1601, %v1654
    %v1656 = vpop.f32.mrb[0].mxu0
    %1657 = vdwg.mxu0
    %v1658 = vmul.f32 %v1652, %v1652
    %v1659 = vmul.f32 %v1655, %v1655
    %v1660 = vmul.f32 %v1652, %v1658
    %v1661 = vmul.f32 %v1655, %v1659
    %v1662 = vmul.f32 %v1660, 0.044715
    %v1663 = vmul.f32 %v1661, 0.044715
    %v1664 = vadd.f32 %v1652, %v1662
    %v1665 = vadd.f32 %v1655, %v1663
    %v1666 = vmul.f32 %v1664, 0.7978846
    %v1667 = vmul.f32 %v1665, 0.7978846
    %v1668 = vtanh.pop %v1666
    %v1669 = vtanh.pop %v1667
    %v1670 = vadd.f32 %v1668, 1.0
    %v1671 = vadd.f32 %v1669, 1.0
    %v1672 = vmul.f32 %v1670, 0.5
    %v1673 = vmul.f32 %v1671, 0.5
    %v1674 = vmul.f32 %v1652, %v1672
    %v1675 = vmul.f32 %v1655, %v1673
    %v1676 = vpack.c.bf16 %v1675, %v1674
    %v1677 = vld [vmem:[%s6] sm:$0xf]
    %v1678 = vld [vmem:[%s6 + $0x4] sm:$0xf]
    %v1679 = vld [vmem:[%s6 + $0x8] sm:$0xf]
    %v1680 = vld [vmem:[%s6 + $0xc] sm:$0xf]
    %v1681 = vld [vmem:[%s6 + $0x10] sm:$0xf]
    %v1682 = vld [vmem:[%s6 + $0x14] sm:$0xf]
    %v1683 = vld [vmem:[%s6 + $0x18] sm:$0xf]
    %v1684 = vld [vmem:[%s6 + $0x1c] sm:$0xf]
    %v1685 = vld [vmem:[%s6 + $0x20] sm:$0xf]
    %v1686 = vld [vmem:[%s6 + $0x24] sm:$0xf]
    %v1687 = vld [vmem:[%s6 + $0x28] sm:$0xf]
    %v1688 = vld [vmem:[%s6 + $0x2c] sm:$0xf]
    %v1689 = vld [vmem:[%s6 + $0x30] sm:$0xf]
    %v1690 = vld [vmem:[%s6 + $0x34] sm:$0xf]
    %v1691 = vld [vmem:[%s6 + $0x38] sm:$0xf]
    %v1692 = vld [vmem:[%s6 + $0x3c] sm:$0xf]
    %v1693 = vlaneseq
    %v1694 = vshrl.u32 %v1693, 7
    %v1695 = vsub.s32 5, %v1694
    %v1696 = vrot.slane %v30, %v1695
    %v1713 = vunpack.c.l.b16 %v1677
    %v1714 = vunpack.c.l.b16 %v1678
    %v1715 = vunpack.c.l.b16 %v1679
    %v1716 = vunpack.c.l.b16 %v1680
    %v1717 = vunpack.c.l.b16 %v1681
    %v1718 = vunpack.c.l.b16 %v1682
    %v1719 = vunpack.c.l.b16 %v1683
    %v1720 = vunpack.c.l.b16 %v1684
    %v1721 = vunpack.c.l.b16 %v1685
    %v1722 = vunpack.c.l.b16 %v1686
    %v1723 = vunpack.c.l.b16 %v1687
    %v1724 = vunpack.c.l.b16 %v1688
    %v1725 = vunpack.c.l.b16 %v1689
    %v1726 = vunpack.c.l.b16 %v1690
    %v1727 = vunpack.c.l.b16 %v1691
    %v1728 = vunpack.c.l.b16 %v1692
    %v1729 = vpack.c.b16 %v1714, %v1713
    %v1730 = vpack.c.b16 %v1716, %v1715
    %v1731 = vpack.c.b16 %v1718, %v1717
    %v1732 = vpack.c.b16 %v1720, %v1719
    %v1733 = vpack.c.b16 %v1722, %v1721
    %v1734 = vpack.c.b16 %v1724, %v1723
    %v1735 = vpack.c.b16 %v1726, %v1725
    %v1736 = vpack.c.b16 %v1728, %v1727
    %1745 = vmatprep.subr.bf16.mxu0 0
    %1746 = vmatpush1.bf16.msra.mxu0 %v1729
    %1747 = vmatprep.subr.bf16.mxu0 0
    %1748 = vmatpush1.bf16.msra.mxu0 %v1730
    %1749 = vmatprep.subr.bf16.mxu0 0
    %1750 = vmatpush1.bf16.msra.mxu0 %v1731
    %1751 = vmatprep.subr.bf16.mxu0 0
    %1752 = vmatpush1.bf16.msra.mxu0 %v1732
    %1753 = vmatprep.subr.bf16.mxu0 0
    %1754 = vmatpush1.bf16.msra.mxu0 %v1733
    %1755 = vmatprep.subr.bf16.mxu0 0
    %1756 = vmatpush1.bf16.msra.mxu0 %v1734
    %1757 = vmatprep.subr.bf16.mxu0 0
    %1758 = vmatpush1.bf16.msra.mxu0 %v1735
    %1759 = vmatprep.subr.bf16.mxu0 0
    %1760 = vmatpush1.bf16.msra.mxu0 %v1736
    %1761 = vmatprep.subr.bf16.mxu0 0
    %1762 = vmatpush1.bf16.msra.mxu0 0
    %1763 = vmatprep.subr.bf16.mxu0 0
    %1764 = vmatpush1.bf16.msra.mxu0 0
    %1765 = vmatprep.subr.bf16.mxu0 0
    %1766 = vmatpush1.bf16.msra.mxu0 0
    %1767 = vmatprep.subr.bf16.mxu0 0
    %1768 = vmatpush1.bf16.msra.mxu0 0
    %1769 = vmatprep.subr.bf16.mxu0 0
    %1770 = vmatpush1.bf16.msra.mxu0 0
    %1771 = vmatprep.subr.bf16.mxu0 0
    %1772 = vmatpush1.bf16.msra.mxu0 0
    %1773 = vmatprep.subr.bf16.mxu0 0
    %1774 = vmatpush1.bf16.msra.mxu0 0
    %1775 = vmatprep.subr.bf16.mxu0 0
    %1776 = vmatpush1.bf16.msra.mxu0 0
    %1777 = vmatprep.mubr.bf16.mxu0 0
    %1778 = vmatmul.mubr.bf16.gmra.mrb[0].mxu0 %v1676
    %v1779 = vpop.f32.mrb[0].mxu0
    %v1780 = vadd.f32 %v1696, %v1779
    %v1781 = vpop.f32.mrb[0].mxu0
    %v1782 = vpop.f32.mrb[0].mxu0
    %v1783 = vadd.f32 %v1696, %v1782
    %v1784 = vpop.f32.mrb[0].mxu0
    %1785 = vdwg.mxu0
    %v1786 = vadd.f32 %v1553, %v1780
    %v1787 = vadd.f32 %v1554, %v1783
    %1788 = vst.msk [vmem:[#allocation2] sm:$0xff] %vm31, %v1786
    %1789 = vst.msk [vmem:[#allocation2 + $0x8] sm:$0xff] %vm31, %v1787
    // Predicated region
    $region30: #{tpu_custom_call.1} parent=1 // pred_check
      _
    $region31: #{tpu_custom_call.1} parent=1 // pred_check_branch
      %1791 = sbr.rel (0) target = $region33
    $region32: #{tpu_custom_call.1} parent=1 // pred_region
      %s1793 = ssub.s32 256, 256
      %1794 = vsyncadd [#allocation3], %s1793
      %s1795 = sshll.u32 [#allocation2], 4
      %s1796 = int_to_ptr.vmem [resolvable:$true] %s1795
      %1801 = dma.vmem_to_hbm [thread:$0]  %s1796, 256, %s7, [#allocation3], 128, 128, 8
    $region33: #{tpu_custom_call.1} parent=1 // pred_fallthru
      _
    // Predicated region
    $region34: #{tpu_custom_call.1} parent=1 // pred_check
      _
    $region35: #{tpu_custom_call.1} parent=1 // pred_check_branch
      %1803 = sbr.rel (0) target = $region37
    $region36: #{tpu_custom_call.1} parent=1 // pred_region
      %1804 = dma.done [#allocation3], 256
    $region37: #{tpu_custom_call.1} parent=1 // pred_fallthru
      _
    %1805 = vsyncpa [#allocation3], 1

</llo_original>
